<compile_context>
chip_gen: v5e
topology: v5e:2x2
jax: 0.10.0
libtpu: 0.0.40
codegen_flags: <defaults>
</compile_context>

<pallas_src>
import functools
import math

import jax
import jax.numpy as jnp
from jax.experimental import pallas as pl
from jax.experimental.pallas import tpu as pltpu

BN_EPS = 1e-3            # efficientnet_pytorch batch_norm_epsilon
SE_RATIO = 0.25
WIDTH, DEPTH = 1.8, 2.6  # EfficientNet-B6 scaling coefficients

_VMEM_LIMIT = 48 * 1024 * 1024
_CP_MM = pltpu.CompilerParams(
    dimension_semantics=("parallel", "parallel", "arbitrary"),
    vmem_limit_bytes=_VMEM_LIMIT)
_CP_DW = pltpu.CompilerParams(
    dimension_semantics=("parallel",),
    vmem_limit_bytes=_VMEM_LIMIT)


def _ru(x, m):
    return ((x + m - 1) // m) * m


# ---------------------------------------------------------------------------
# Kernel 1: tiled matmul with fused scale/shift + activation (+ residual)
# ---------------------------------------------------------------------------
def _mm_kernel(a_ref, b_ref, s_ref, *rest, act, has_res):
    if has_res:
        r_ref, o_ref, acc_ref = rest
    else:
        o_ref, acc_ref = rest
        r_ref = None
    k = pl.program_id(2)

    @pl.when(k == 0)
    def _():
        acc_ref[...] = jnp.zeros_like(acc_ref)

    acc_ref[...] += jnp.dot(a_ref[...], b_ref[...],
                            preferred_element_type=jnp.float32)

    @pl.when(k == pl.num_programs(2) - 1)
    def _():
        y = acc_ref[...] * s_ref[0:1, :] + s_ref[1:2, :]   # folded BN / bias
        if act == "swish":
            y = y * jax.nn.sigmoid(y)
        elif act == "sigmoid":
            y = jax.nn.sigmoid(y)
        if has_res:
            y = y + r_ref[...].astype(jnp.float32)         # fused skip-add
        o_ref[...] = y.astype(o_ref.dtype)


_MM_CACHE = {}


def _get_mm(Mp, Kp, Np, tm, tk, tn, act, has_res, out_dtype):
    key = (Mp, Kp, Np, tm, tk, tn, act, has_res, jnp.dtype(out_dtype).name)
    fn = _MM_CACHE.get(key)
    if fn is None:
        in_specs = [
            pl.BlockSpec((tm, tk), lambda i, j, k: (i, k)),
            pl.BlockSpec((tk, tn), lambda i, j, k: (k, j)),
            pl.BlockSpec((8, tn), lambda i, j, k: (0, j)),
        ]
        if has_res:
            in_specs.append(pl.BlockSpec((tm, tn), lambda i, j, k: (i, j)))
        fn = jax.jit(pl.pallas_call(
            functools.partial(_mm_kernel, act=act, has_res=has_res),
            grid=(Mp // tm, Np // tn, Kp // tk),
            in_specs=in_specs,
            out_specs=pl.BlockSpec((tm, tn), lambda i, j, k: (i, j)),
            out_shape=jax.ShapeDtypeStruct((Mp, Np), out_dtype),
            scratch_shapes=[pltpu.VMEM((tm, tn), jnp.float32)],
            compiler_params=_CP_MM))
        _MM_CACHE[key] = fn
    return fn


def dense_act(x2d, layer, act="none", residual=None, out_dtype=jnp.bfloat16):
    """x2d[M,K] @ pre-packed layer weights [Kp,Np] (bf16) with fused epilogue."""
    M, K = x2d.shape
    Kp, Np = layer["w"].shape
    N = layer["N"]
    assert K == layer["K"], (K, layer["K"])
    tm = min(256, _ru(M, 8))
    Mp = _ru(M, tm)
    tn = 256 if Np % 256 == 0 else 128
    tk = 512 if Kp % 512 == 0 else (256 if Kp % 256 == 0 else 128)
    a = x2d.astype(jnp.bfloat16)
    if (Mp, Kp) != (M, K):
        a = jnp.pad(a, ((0, Mp - M), (0, Kp - K)))
    args = [a, layer["w"], layer["ss"]]
    if residual is not None:
        r = residual.astype(jnp.bfloat16)
        if r.shape != (Mp, Np):
            r = jnp.pad(r, ((0, Mp - M), (0, Np - N)))
        args.append(r)
    out = _get_mm(Mp, Kp, Np, tm, tk, tn, act, residual is not None,
                  out_dtype)(*args)
    return out[:M, :N]


# ---------------------------------------------------------------------------
# Kernel 2: depthwise kxk conv (valid, stride 1) + fused BN + swish
# ---------------------------------------------------------------------------
def _dw_kernel(x_ref, w_ref, s_ref, o_ref, *, k, ho, wo):
    rb = 8                                   # output-row chunk (bounds live values)
    for r0 in range(0, ho, rb):
        rr = min(rb, ho - r0)
        acc = None
        for di in range(k):
            for dj in range(k):
                tap = x_ref[0, r0 + di:r0 + di + rr,
                            dj:dj + wo, :].astype(jnp.float32)
                ti = di * k + dj
                term = tap * w_ref[ti:ti + 1, :]
                acc = term if acc is None else acc + term
        y = acc * s_ref[0:1, :] + s_ref[1:2, :]
        y = y * jax.nn.sigmoid(y)            # depthwise is always BN + swish
        o_ref[0, r0:r0 + rr, :, :] = y.astype(o_ref.dtype)


_DW_CACHE = {}


def _get_dw(n, hp, wp, c, k, ho, wo):
    key = (n, hp, wp, c, k, ho, wo)
    fn = _DW_CACHE.get(key)
    if fn is None:
        fn = jax.jit(pl.pallas_call(
            functools.partial(_dw_kernel, k=k, ho=ho, wo=wo),
            grid=(n,),
            in_specs=[
                pl.BlockSpec((1, hp, wp, c), lambda b: (b, 0, 0, 0)),
                pl.BlockSpec((k * k, c), lambda b: (0, 0)),
                pl.BlockSpec((8, c), lambda b: (0, 0)),
            ],
            out_specs=pl.BlockSpec((1, ho, wo, c), lambda b: (b, 0, 0, 0)),
            out_shape=jax.ShapeDtypeStruct((n, ho, wo, c), jnp.bfloat16),
            compiler_params=_CP_DW))
        _DW_CACHE[key] = fn
    return fn


def _same_pad(h, w, k, stride):
    ho, wo = -(-h // stride), -(-w // stride)
    ph = max((ho - 1) * stride + k - h, 0)
    pw = max((wo - 1) * stride + k - w, 0)
    return ho, wo, (ph // 2, ph - ph // 2), (pw // 2, pw - pw // 2)


def depthwise_bn_swish(x, layer, stride):
    """TF-'same' padded depthwise conv + folded BN + swish."""
    n, h, w, _ = x.shape
    k = layer["k"]
    ho, wo, (pt, pb), (pw_l, pw_r) = _same_pad(h, w, k, stride)
    xp = jnp.pad(x, ((0, 0), (pt, pb), (pw_l, pw_r), (0, 0)))
    hp, wp = h + pt + pb, w + pw_l + pw_r
    ho1, wo1 = hp - k + 1, wp - k + 1          # stride-1 valid output size
    out = _get_dw(n, hp, wp, layer["C"], k, ho1, wo1)(xp, layer["w"], layer["ss"])
    if stride > 1:                             # strided conv == subsampled s1 conv
        out = out[:, ::stride, ::stride, :]
    return out[:, :ho, :wo, :]


def conv_same_im2col(x, layer, k, stride, act):
    """Stem 3x3/s2 conv (3 input channels) via cheap im2col + fused matmul."""
    n, h, w, c = x.shape
    ho, wo, (pt, pb), (pw_l, pw_r) = _same_pad(h, w, k, stride)
    xp = jnp.pad(x, ((0, 0), (pt, pb), (pw_l, pw_r), (0, 0)))
    cols = []
    for di in range(k):
        for dj in range(k):
            cols.append(xp[:, di:di + stride * (ho - 1) + 1:stride,
                           dj:dj + stride * (wo - 1) + 1:stride, :])
    a = jnp.concatenate(cols, axis=-1).reshape(n * ho * wo, k * k * c)
    out = dense_act(a, layer, act=act)
    return out.reshape(n, ho, wo, layer["N"])


# ---------------------------------------------------------------------------
# Parameter construction (deterministic; weights pre-packed for the kernels)
# ---------------------------------------------------------------------------
def _round_filters(f):
    f *= WIDTH
    new = max(8, int(f + 4) // 8 * 8)
    if new < 0.9 * f:
        new += 8
    return int(new)


def _round_repeats(r):
    return int(math.ceil(DEPTH * r))


def _bn_fold(c):
    # eval-mode BN with gamma=1, beta=0, running_mean=0, running_var=1
    return (jnp.full((c,), 1.0 / (1.0 + BN_EPS) ** 0.5, jnp.float32),
            jnp.zeros((c,), jnp.float32))


def _pack_ss(scale, shift, np_):
    c = scale.shape[0]
    ss = jnp.zeros((8, np_), jnp.float32)
    return ss.at[0, :c].set(scale).at[1, :c].set(shift)


def _matmul_layer(key, k_in, n_out, *, bn=False, bias=False, uniform=False):
    kp, np_ = _ru(k_in, 128), _ru(n_out, 128)
    wkey, bkey = jax.random.split(key)
    if uniform:
        bound = 1.0 / k_in ** 0.5
        w = jax.random.uniform(wkey, (k_in, n_out), jnp.float32, -bound, bound)
    else:
        w = jax.random.normal(wkey, (k_in, n_out), jnp.float32) * (2.0 / k_in) ** 0.5
    # rows ordered (tap-row, tap-col, cin) to match conv_same_im2col / 1x1 convs
    wp = jnp.zeros((kp, np_), jnp.bfloat16).at[:k_in, :n_out].set(
        w.astype(jnp.bfloat16))
    if bn:
        scale, shift = _bn_fold(n_out)
    else:
        scale = jnp.ones((n_out,), jnp.float32)
        if bias:
            bound = 1.0 / k_in ** 0.5
            shift = jax.random.uniform(bkey, (n_out,), jnp.float32, -bound, bound)
        else:
            shift = jnp.zeros((n_out,), jnp.float32)
    return {"w": wp, "ss": _pack_ss(scale, shift, np_), "K": k_in, "N": n_out}


def _dw_layer(key, c, k):
    w = jax.random.normal(key, (k * k, c), jnp.float32) * (2.0 / (k * k)) ** 0.5
    scale, shift = _bn_fold(c)
    ss = jnp.zeros((8, c), jnp.float32).at[0, :].set(scale).at[1, :].set(shift)
    return {"w": w, "ss": ss, "k": k, "C": c}


_BASE_BLOCKS = [   # (repeats, kernel, stride, expand_ratio, in_filters, out_filters)
    (1, 3, 1, 1, 32, 16),
    (2, 3, 2, 6, 16, 24),
    (2, 5, 2, 6, 24, 40),
    (3, 3, 2, 6, 40, 80),
    (3, 5, 1, 6, 80, 112),
    (4, 5, 2, 6, 112, 192),
    (1, 3, 1, 6, 192, 320),
]


def init_efficientnet_b6_params(key, num_classes):
    keys = iter(jax.random.split(key, 1024))
    stem_out = _round_filters(32)                                 # 56
    params = {"stem": _matmul_layer(next(keys), 3 * 3 * 3, stem_out, bn=True)}
    blocks = []
    for (r0, k, s0, e, i0, o0) in _BASE_BLOCKS:
        cin, cout = _round_filters(i0), _round_filters(o0)
        for bi in range(_round_repeats(r0)):
            b_in = cin if bi == 0 else cout
            stride = s0 if bi == 0 else 1
            c_exp = b_in * e
            c_se = max(1, int(b_in * SE_RATIO))
            blk = {"stride": stride}
            if e != 1:
                blk["expand"] = _matmul_layer(next(keys), b_in, c_exp, bn=True)
            blk["dw"] = _dw_layer(next(keys), c_exp, k)
            blk["se_reduce"] = _matmul_layer(next(keys), c_exp, c_se, bias=True)
            blk["se_expand"] = _matmul_layer(next(keys), c_se, c_exp, bias=True)
            blk["project"] = _matmul_layer(next(keys), c_exp, cout, bn=True)
            blocks.append(blk)
    params["blocks"] = blocks                                      # 45 MBConv blocks
    head_in, head_out = _round_filters(320), _round_filters(1280)  # 576 -> 2304
    params["head"] = _matmul_layer(next(keys), head_in, head_out, bn=True)
    params["fc"] = _matmul_layer(next(keys), head_out, num_classes,
                                 bias=True, uniform=True)
    return params


# ---------------------------------------------------------------------------
# Forward pass (eval mode)
# ---------------------------------------------------------------------------
def _mbconv(x, blk):
    inputs = x
    n, h, w, cin = x.shape
    if "expand" in blk:                                   # 1x1 expand + BN + swish
        x = dense_act(x.reshape(n * h * w, cin), blk["expand"],
                      act="swish").reshape(n, h, w, blk["expand"]["N"])
    x = depthwise_bn_swish(x, blk["dw"], blk["stride"])   # kxk depthwise + BN + swish
    n2, h2, w2, ce = x.shape
    # squeeze & excitation (global pool / broadcast multiply left as XLA glue)
    s = x.astype(jnp.float32).mean(axis=(1, 2))
    s = dense_act(s, blk["se_reduce"], act="swish")
    s = dense_act(s, blk["se_expand"], act="sigmoid", out_dtype=jnp.float32)
    x = (x.astype(jnp.float32) * s[:, None, None, :]).astype(jnp.bfloat16)
    cout = blk["project"]["N"]
    use_res = blk["stride"] == 1 and cin == cout          # id_skip condition
    res = inputs.reshape(n * h * w, cin) if use_res else None
    x = dense_act(x.reshape(n2 * h2 * w2, ce), blk["project"],
                  act="none", residual=res)               # 1x1 project + BN (+skip)
    return x.reshape(n2, h2, w2, cout)


def efficientnet_b6_forward(params, x_nchw):
    x = jnp.transpose(x_nchw, (0, 2, 3, 1)).astype(jnp.bfloat16)   # NCHW -> NHWC
    x = conv_same_im2col(x, params["stem"], k=3, stride=2, act="swish")
    for blk in params["blocks"]:
        x = _mbconv(x, blk)
    n, h, w, c = x.shape
    x = dense_act(x.reshape(n * h * w, c), params["head"],
                  act="swish").reshape(n, h, w, params["head"]["N"])
    x = x.astype(jnp.float32).mean(axis=(1, 2))            # adaptive_avg_pool2d(1)
    # TODO(synk): nn.Dropout / drop_connect are identity in eval mode.
    logits = dense_act(x, params["fc"], act="none", out_dtype=jnp.float32)
    return logits


if __name__ == "__main__":
    num_classes = 10
    key = jax.random.PRNGKey(0)
    pkey, xkey = jax.random.split(key)
    params = init_efficientnet_b6_params(pkey, num_classes)
    x = jax.random.normal(xkey, (2, 3, 64, 64), jnp.float32)   # small NCHW input
    logits = jax.block_until_ready(efficientnet_b6_forward(params, x))
    assert logits.shape == (2, num_classes), logits.shape
    assert bool(jnp.all(jnp.isfinite(logits)))
    print("KERNEL_OK")
</pallas_src>

<mosaic_0001>
module attributes {stable_mosaic.version = 11 : i64} {
  func.func @_mm_kernel(%arg0: i32, %arg1: i32, %arg2: i32, %arg3: memref<256x128xbf16, #tpu.memory_space<vmem>>, %arg4: memref<128x128xbf16, #tpu.memory_space<vmem>>, %arg5: memref<8x128xf32, #tpu.memory_space<vmem>>, %arg6: memref<256x128xbf16, #tpu.memory_space<vmem>>, %arg7: memref<256x128xf32, #tpu.memory_space<vmem>>) attributes {dimension_semantics = [#tpu.dimension_semantics<parallel>, #tpu.dimension_semantics<parallel>, #tpu.dimension_semantics<arbitrary>], iteration_bounds = array<i64: 8, 1, 1>, scalar_prefetch = 0 : i64, scratch_operands = 1 : i64, tpu.core_type = #tpu.core_type<tc>, window_params = [{transform_indices = @transform_0, window_bounds = array<i64: 256, 128>}, {transform_indices = @transform_1, window_bounds = array<i64: 128, 128>}, {transform_indices = @transform_2, window_bounds = array<i64: 8, 128>}, {transform_indices = @transform_3, window_bounds = array<i64: 256, 128>}]} {
    %c0_i32 = arith.constant 0 : i32
    %0 = arith.cmpi eq, %arg2, %c0_i32 : i32
    %1 = arith.extui %0 : i1 to i32
    %c0_i32_0 = arith.constant 0 : i32
    %2 = arith.cmpi ne, %1, %c0_i32_0 : i32
    scf.if %2 {
      %cst_10 = arith.constant 0.000000e+00 : f32
      %12 = vector.broadcast %cst_10 : f32 to vector<256x128xf32>
      %c0_11 = arith.constant 0 : index
      %c0_12 = arith.constant 0 : index
      %13 = vector.load %arg7[%c0_11, %c0_12] : memref<256x128xf32, #tpu.memory_space<vmem>>, vector<256x128xf32>
      tpu.vector_store %arg7[%c0_11, %c0_12], %12 {strides = array<i32>} : memref<256x128xf32, #tpu.memory_space<vmem>>, vector<256x128xf32>,
    } else {
    }
    %c0 = arith.constant 0 : index
    %c0_1 = arith.constant 0 : index
    %3 = vector.load %arg7[%c0, %c0_1] : memref<256x128xf32, #tpu.memory_space<vmem>>, vector<256x128xf32>
    %c0_2 = arith.constant 0 : index
    %c0_3 = arith.constant 0 : index
    %4 = vector.load %arg3[%c0_2, %c0_3] : memref<256x128xbf16, #tpu.memory_space<vmem>>, vector<256x128xbf16>
    %c0_4 = arith.constant 0 : index
    %c0_5 = arith.constant 0 : index
    %5 = vector.load %arg4[%c0_4, %c0_5] : memref<128x128xbf16, #tpu.memory_space<vmem>>, vector<128x128xbf16>
    %cst = arith.constant dense<0.000000e+00> : vector<256x128xf32>
    %6 = tpu.matmul %4, %5, %cst {dimension_numbers = #tpu.dot_dimension_numbers<[1], [0], [0], [1], [0, 0, 1, 1], [], []>} : vector<256x128xbf16>, vector<128x128xbf16>, vector<256x128xf32> -> vector<256x128xf32>
    %7 = arith.addf %3, %6 : vector<256x128xf32>
    %c0_6 = arith.constant 0 : index
    %c0_7 = arith.constant 0 : index
    %8 = vector.load %arg7[%c0_6, %c0_7] : memref<256x128xf32, #tpu.memory_space<vmem>>, vector<256x128xf32>
    tpu.vector_store %arg7[%c0_6, %c0_7], %7 {strides = array<i32>} : memref<256x128xf32, #tpu.memory_space<vmem>>, vector<256x128xf32>,
    %c0_i32_8 = arith.constant 0 : i32
    %9 = arith.cmpi eq, %arg2, %c0_i32_8 : i32
    %10 = arith.extui %9 : i1 to i32
    %c0_i32_9 = arith.constant 0 : i32
    %11 = arith.cmpi ne, %10, %c0_i32_9 : i32
    scf.if %11 {
      %c0_10 = arith.constant 0 : index
      %c0_11 = arith.constant 0 : index
      %12 = vector.load %arg7[%c0_10, %c0_11] : memref<256x128xf32, #tpu.memory_space<vmem>>, vector<256x128xf32>
      %c0_12 = arith.constant 0 : index
      %c0_13 = arith.constant 0 : index
      %13 = vector.load %arg5[%c0_12, %c0_13] : memref<8x128xf32, #tpu.memory_space<vmem>>, vector<1x128xf32>
      %14 = vector.broadcast %13 : vector<1x128xf32> to vector<256x128xf32>
      %15 = arith.mulf %12, %14 : vector<256x128xf32>
      %c1 = arith.constant 1 : index
      %c0_14 = arith.constant 0 : index
      %16 = vector.load %arg5[%c1, %c0_14] : memref<8x128xf32, #tpu.memory_space<vmem>>, vector<1x128xf32>
      %17 = vector.broadcast %16 : vector<1x128xf32> to vector<256x128xf32>
      %18 = arith.addf %15, %17 : vector<256x128xf32>
      %19 = arith.negf %18 : vector<256x128xf32>
      %20 = math.exp %19 : vector<256x128xf32>
      %cst_15 = arith.constant 1.000000e+00 : f32
      %21 = vector.broadcast %cst_15 : f32 to vector<256x128xf32>
      %22 = arith.addf %21, %20 : vector<256x128xf32>
      %23 = arith.divf %21, %22 : vector<256x128xf32>
      %24 = arith.mulf %18, %23 : vector<256x128xf32>
      %25 = arith.truncf %24 : vector<256x128xf32> to vector<256x128xbf16>
      %c0_16 = arith.constant 0 : index
      %c0_17 = arith.constant 0 : index
      %26 = vector.load %arg6[%c0_16, %c0_17] : memref<256x128xbf16, #tpu.memory_space<vmem>>, vector<256x128xbf16>
      tpu.vector_store %arg6[%c0_16, %c0_17], %25 {strides = array<i32>} : memref<256x128xbf16, #tpu.memory_space<vmem>>, vector<256x128xbf16>,
    } else {
    }
    return
  }
  func.func @transform_0(%arg0: i32, %arg1: i32, %arg2: i32) -> (i32, i32) {
    %c0_i32 = arith.constant 0 : i32
    return %arg0, %arg2 : i32, i32
  }
  func.func @transform_1(%arg0: i32, %arg1: i32, %arg2: i32) -> (i32, i32) {
    %c0_i32 = arith.constant 0 : i32
    return %arg2, %arg1 : i32, i32
  }
  func.func @transform_2(%arg0: i32, %arg1: i32, %arg2: i32) -> (i32, i32) {
    %c0_i32 = arith.constant 0 : i32
    %c0_i32_0 = arith.constant 0 : i32
    return %c0_i32, %arg1 : i32, i32
  }
  func.func @transform_3(%arg0: i32, %arg1: i32, %arg2: i32) -> (i32, i32) {
    %c0_i32 = arith.constant 0 : i32
    return %arg0, %arg1 : i32, i32
  }
}

</mosaic_0001>

<llo_original>
// kernel: tpu_custom_call.1
$region0: #{tpu_custom_call.1}
  #allocation0 [shape = 'u32[]', space=smem, size = 0x4, offset = 0x4, fixed_abs, tag = 'smem constant byte address 0x4 - core index']
  #allocation1 [shape = 'u32[72,128]{1,0:T(1,128)}', space=vmem, size = 0x9000, scoped, tag = 'internal scratch']
  #allocation2 [shape = 'f32[256,128]{1,0:T(8,128)}', space=vmem, size = 0x20000, scoped, tag = 'scratch operand']
  %s0 = inlined_call_operand.hbm [shape: bf16[2048,128], index: 0, kind: input, shape index: {}]
  %s1 = inlined_call_operand.hbm [shape: bf16[128,128], index: 1, kind: input, shape index: {}]
  %s2 = inlined_call_operand.hbm [shape: f32[8,128], index: 2, kind: input, shape index: {}]
  %s3 = inlined_call_operand.hbm [shape: bf16[2048,128], index: 3, kind: output, shape index: {}]
  %s4 = sld [smem:[#allocation0]]
  $region65: #{tpu_custom_call.1} parent=0
    _
  %s6 = ssub.s32 1, %s4
  %s7 = scalar_select 0, %s6, %s4
  $region1: #{tpu_custom_call.1} parent=0
    #allocation3 [shape = 'u8[131072]{0}', space=vmem, size = 0x20000, scoped, tag = 'input window, operand 0']
    #allocation4 [shape = 's32[2]{0}', space=sflag, size = 0x8, scoped, tag = 'scoped memory for tpu_custom_call.1']
    #allocation5 [shape = 's32[2]{0}', space=sflag, size = 0x8, scoped, tag = 'scoped memory for tpu_custom_call.1']
    #allocation6 [shape = 'u8[32768]{0}', space=vmem, size = 0x8000, scoped, tag = 'input window, operand 1, single buffered']
    #allocation7 [shape = 's32[1]{0}', space=sflag, size = 0x4, scoped, tag = 'scoped memory for tpu_custom_call.1']
    #allocation8 [shape = 'u8[4096]{0}', space=vmem, size = 0x1000, scoped, tag = 'input window, operand 2, single buffered']
    #allocation9 [shape = 'u8[131072]{0}', space=vmem, size = 0x20000, scoped, tag = 'output window, operand 0']
    %8 = vsyncpa [#allocation4], 0
    %s9 = scalar_lea.sflag [#allocation4], 1
    %10 = vsyncpa %s9, 0
    %11 = vsyncpa [#allocation7], 0
    %12 = vsyncpa [#allocation5], 0
    %s13 = scalar_lea.sflag [#allocation5], 1
    %14 = vsyncpa %s13, 0
    loop: start=0, step=1, limit=10
    $region2: #{tpu_custom_call.1} parent=1 // loop_pre_header
      _
    $region3: #{tpu_custom_call.1} parent=1 // loop_header
      %s16 = sphi 0, %s20
      %p17 = scmp.ge.s32.totalorder %s16, 10
      %s23 = sphi 0, %s42
      %s24 = sphi 0, %s38
      %s25 = sphi 0, %s34
      %s26 = sphi 0, %s23
      %s27 = sphi 0, %s24
      %s28 = sphi 0, %s25
      %s29 = sphi 0, %s26
      %s30 = sphi 0, %s27
      %s31 = sphi 0, %s28
      %s47 = sphi 0, %s49
      %s50 = sphi 0, %s47
      %s51 = sphi 0, %s50
      %s67 = sphi 0, %s51
      %s75 = sphi 0, %s77
      %s78 = sphi 0, %s75
      %s79 = sphi 0, %s78
      %s95 = sphi 0, %s79
      %s101 = sphi 0, %s103
      %s104 = sphi 0, %s101
      %s105 = sphi 0, %s104
      %s121 = sphi 0, %s105
      %s129 = sphi 0, %s131
      %s132 = sphi 0, %s129
      %s133 = sphi 0, %s132
      %s149 = sphi 0, %s133
    $region4: #{tpu_custom_call.1} parent=1 // loop_header_branch
      %19 = sbr.rel (%p17) target = $region8
    $region5: #{tpu_custom_call.1} parent=1 // loop_body
      %s21 = ssub.s32 %s16, 1
      %s22 = ssub.s32 %s16, 2
      %s32 = sadd.s32 1, %s25
      %p33 = scmp.ge.s32.totalorder %s32, 1
      %s34 = scalar_select %p33, 0, %s32
      %s35 = sadd.s32 1, %s24
      %s36 = scalar_select %p33, %s35, %s24
      %p37 = scmp.ge.s32.totalorder %s36, 1
      %s38 = scalar_select %p37, 0, %s36
      %s39 = sadd.s32 1, %s23
      %s40 = scalar_select %p37, %s39, %s23
      %p41 = scmp.ge.s32.totalorder %s40, 8
      %s42 = scalar_select %p41, 0, %s40
      %s43 = ssub.s32 %s23, %s42
      %s44 = ssub.s32 %s25, %s34
      %s45 = sor.u32 %s43, %s44
      %p46 = scmp.eq.s32.totalorder %s45, 0
      %s48 = sadd.s32 %s47, 1
      %s49 = scalar_select %p46, %s47, %s48
      %p52 = pneg %p46
      %p53 = scmp.eq.s32.totalorder %s16, 7
      %p54 = por %p52, %p53
      %p55 = scmp.ne.s32.totalorder %s47, %s50
      %p56 = scmp.eq.s32.totalorder %s16, 0
      %p57 = por %p55, %p56
      %p58 = scmp.ne.s32.totalorder %s47, %s50
      %p59 = scmp.eq.s32.totalorder %s21, 7
      %p60 = por %p58, %p59
      %p61 = scmp.ne.s32.totalorder %s50, %s51
      %p62 = scmp.eq.s32.totalorder %s21, 0
      %p63 = por %p61, %p62
      %p64 = scmp.ne.s32.totalorder %s50, %s51
      %p65 = scmp.eq.s32.totalorder %s22, 7
      %p66 = por %p64, %p65
      %p68 = scmp.ne.s32.totalorder %s51, %s67
      %p69 = scmp.eq.s32.totalorder %s22, 0
      %p70 = por %p68, %p69
      %s71 = ssub.s32 %s25, %s34
      %s72 = ssub.s32 %s24, %s38
      %s73 = sor.u32 %s71, %s72
      %p74 = scmp.eq.s32.totalorder %s73, 0
      %s76 = sadd.s32 %s75, 1
      %s77 = scalar_select %p74, %s75, %s76
      %p80 = pneg %p74
      %p81 = scmp.eq.s32.totalorder %s16, 7
      %p82 = por %p80, %p81
      %p83 = scmp.ne.s32.totalorder %s75, %s78
      %p84 = scmp.eq.s32.totalorder %s16, 0
      %p85 = por %p83, %p84
      %p86 = scmp.ne.s32.totalorder %s75, %s78
      %p87 = scmp.eq.s32.totalorder %s21, 7
      %p88 = por %p86, %p87
      %p89 = scmp.ne.s32.totalorder %s78, %s79
      %p90 = scmp.eq.s32.totalorder %s21, 0
      %p91 = por %p89, %p90
      %p92 = scmp.ne.s32.totalorder %s78, %s79
      %p93 = scmp.eq.s32.totalorder %s22, 7
      %p94 = por %p92, %p93
      %p96 = scmp.ne.s32.totalorder %s79, %s95
      %p97 = scmp.eq.s32.totalorder %s22, 0
      %p98 = por %p96, %p97
      %s99 = ssub.s32 %s24, %s38
      %p100 = scmp.eq.s32.totalorder %s99, 0
      %s102 = sadd.s32 %s101, 1
      %s103 = scalar_select %p100, %s101, %s102
      %p106 = pneg %p100
      %p107 = scmp.eq.s32.totalorder %s16, 7
      %p108 = por %p106, %p107
      %p109 = scmp.ne.s32.totalorder %s101, %s104
      %p110 = scmp.eq.s32.totalorder %s16, 0
      %p111 = por %p109, %p110
      %p112 = scmp.ne.s32.totalorder %s101, %s104
      %p113 = scmp.eq.s32.totalorder %s21, 7
      %p114 = por %p112, %p113
      %p115 = scmp.ne.s32.totalorder %s104, %s105
      %p116 = scmp.eq.s32.totalorder %s21, 0
      %p117 = por %p115, %p116
      %p118 = scmp.ne.s32.totalorder %s104, %s105
      %p119 = scmp.eq.s32.totalorder %s22, 7
      %p120 = por %p118, %p119
      %p122 = scmp.ne.s32.totalorder %s105, %s121
      %p123 = scmp.eq.s32.totalorder %s22, 0
      %p124 = por %p122, %p123
      %s125 = ssub.s32 %s23, %s42
      %s126 = ssub.s32 %s24, %s38
      %s127 = sor.u32 %s125, %s126
      %p128 = scmp.eq.s32.totalorder %s127, 0
      %s130 = sadd.s32 %s129, 1
      %s131 = scalar_select %p128, %s129, %s130
      %p134 = pneg %p128
      %p135 = scmp.eq.s32.totalorder %s16, 7
      %p136 = por %p134, %p135
      %p137 = scmp.ne.s32.totalorder %s129, %s132
      %p138 = scmp.eq.s32.totalorder %s16, 0
      %p139 = por %p137, %p138
      %p140 = scmp.ne.s32.totalorder %s129, %s132
      %p141 = scmp.eq.s32.totalorder %s21, 7
      %p142 = por %p140, %p141
      %p143 = scmp.ne.s32.totalorder %s132, %s133
      %p144 = scmp.eq.s32.totalorder %s21, 0
      %p145 = por %p143, %p144
      %p146 = scmp.ne.s32.totalorder %s132, %s133
      %p147 = scmp.eq.s32.totalorder %s22, 7
      %p148 = por %p146, %p147
      %p150 = scmp.ne.s32.totalorder %s133, %s149
      %p151 = scmp.eq.s32.totalorder %s22, 0
      %p152 = por %p150, %p151
      %p153 = scmp.le.s32.totalorder 1, %s16
      %p154 = scmp.lt.s32.totalorder %s16, 9
      %p155 = pnand %p153, %p154
      %p156 = pneg %p155
      // Predicated region
      $region9: #{tpu_custom_call.1} parent=5 // pred_check
        _
      $region10: #{tpu_custom_call.1} parent=5 // pred_check_branch
        %158 = sbr.rel (%p155) target = $region12
      $region11: #{tpu_custom_call.1} parent=5 // pred_region
        %s159 = ssub.s32 %s16, 1
        // Predicated region
        $region13: #{tpu_custom_call.1} parent=11 // pred_check
          %p160 = pneg %p91
        $region14: #{tpu_custom_call.1} parent=11 // pred_check_branch
          %162 = sbr.rel (%p160) target = $region16
        $region15: #{tpu_custom_call.1} parent=11 // pred_region
          %s163 = smul.u32 16, %s28
          %165 = vsyncadd [#allocation7], 0
          %s166 = sadd.s32 %s27, %s163
          %s167 = smul.addr %s166, 4
          %s168 = scalar_lea.hbm %s1, %s167
          %s169 = sshll.u32 %s168, 4
          %s170 = int_to_ptr.hbm [resolvable:$true] %s169
          %s171 = sshll.u32 [#allocation6], 4
          %s172 = int_to_ptr.vmem [resolvable:$true] %s171
          %177 = dma.hbm_to_vmem [thread:$0]  %s170, 1024, %s172, [#allocation7], 64, 64, 4
        $region16: #{tpu_custom_call.1} parent=11 // pred_fallthru
          _
        // Predicated region
        $region17: #{tpu_custom_call.1} parent=11 // pred_check
          %p178 = pneg %p117
        $region18: #{tpu_custom_call.1} parent=11 // pred_check_branch
          %180 = sbr.rel (%p178) target = $region20
        $region19: #{tpu_custom_call.1} parent=11 // pred_region
          %182 = vsyncadd [#allocation7], 0
          %s183 = smul.addr %s27, 8
          %s184 = scalar_lea.hbm %s2, %s183
          %s186 = sshll.u32 %s184, 4
          %s187 = int_to_ptr.hbm [resolvable:$true] %s186
          %s188 = sshll.u32 [#allocation8], 4
          %s189 = int_to_ptr.vmem [resolvable:$true] %s188
          %191 = dma.hbm_to_vmem [thread:$0]  %s187, 128, %s189, [#allocation7]
        $region20: #{tpu_custom_call.1} parent=11 // pred_fallthru
          _
      $region12: #{tpu_custom_call.1} parent=5 // pred_fallthru
        _
      %p192 = scmp.lt.s32.totalorder %s16, 8
      // Predicated region
      $region21: #{tpu_custom_call.1} parent=5 // pred_check
        %p193 = pneg %p192
      $region22: #{tpu_custom_call.1} parent=5 // pred_check_branch
        %195 = sbr.rel (%p193) target = $region24
      $region23: #{tpu_custom_call.1} parent=5 // pred_region
        // Predicated region
        $region25: #{tpu_custom_call.1} parent=23 // pred_check
          %p196 = pneg %p57
        $region26: #{tpu_custom_call.1} parent=23 // pred_check_branch
          %198 = sbr.rel (%p196) target = $region28
        $region27: #{tpu_custom_call.1} parent=23 // pred_region
          %s199 = sand.u32 %s47, 1
          %s200 = scalar_lea.sflag [#allocation4], %s199
          %s201 = sand.u32 %s47, 1
          %s202 = smul.addr %s201, 128
          %s203 = scalar_lea.vmem [#allocation3], %s202
          %s204 = smul.u32 32, %s23
          %206 = vsyncadd %s200, 0
          %s207 = sadd.s32 %s25, %s204
          %s208 = smul.addr %s207, 4
          %s209 = scalar_lea.hbm %s0, %s208
          %s210 = sshll.u32 %s209, 4
          %s211 = int_to_ptr.hbm [resolvable:$true] %s210
          %s212 = sshll.u32 %s203, 4
          %s213 = int_to_ptr.vmem [resolvable:$true] %s212
          %218 = dma.hbm_to_vmem [thread:$0]  %s211, 2048, %s213, %s200, 64, 64, 4
        $region28: #{tpu_custom_call.1} parent=23 // pred_fallthru
          _
      $region24: #{tpu_custom_call.1} parent=5 // pred_fallthru
        _
      %p219 = scmp.le.s32.totalorder 1, %s16
      %p220 = scmp.lt.s32.totalorder %s16, 9
      %p221 = pnand %p219, %p220
      %p222 = pneg %p221
      // Predicated region
      $region29: #{tpu_custom_call.1} parent=5 // pred_check
        _
      $region30: #{tpu_custom_call.1} parent=5 // pred_check_branch
        %224 = sbr.rel (%p221) target = $region32
      $region31: #{tpu_custom_call.1} parent=5 // pred_region
        %s225 = ssub.s32 %s16, 1
        %s226 = sand.u32 %s50, 1
        %s227 = scalar_lea.sflag [#allocation4], %s226
        %s228 = sand.u32 %s50, 1
        %s229 = smul.addr %s228, 128
        %s230 = scalar_lea.vmem [#allocation3], %s229
        // Predicated region
        $region33: #{tpu_custom_call.1} parent=31 // pred_check
          %p231 = pneg %p63
        $region34: #{tpu_custom_call.1} parent=31 // pred_check_branch
          %233 = sbr.rel (%p231) target = $region36
        $region35: #{tpu_custom_call.1} parent=31 // pred_region
          %235 = dma.done %s227, 2048
        $region36: #{tpu_custom_call.1} parent=31 // pred_fallthru
          _
        // Predicated region
        $region37: #{tpu_custom_call.1} parent=31 // pred_check
          %p236 = pneg %p91
        $region38: #{tpu_custom_call.1} parent=31 // pred_check_branch
          %238 = sbr.rel (%p236) target = $region40
        $region39: #{tpu_custom_call.1} parent=31 // pred_region
          %240 = dma.done [#allocation7], 1024
        $region40: #{tpu_custom_call.1} parent=31 // pred_fallthru
          _
        // Predicated region
        $region41: #{tpu_custom_call.1} parent=31 // pred_check
          %p241 = pneg %p117
        $region42: #{tpu_custom_call.1} parent=31 // pred_check_branch
          %243 = sbr.rel (%p241) target = $region44
        $region43: #{tpu_custom_call.1} parent=31 // pred_region
          %245 = dma.done [#allocation7], 128
        $region44: #{tpu_custom_call.1} parent=31 // pred_fallthru
          _
        %s246 = sand.u32 %s50, 1
        %s247 = scalar_lea.sflag [#allocation4], %s246
        %s248 = sand.u32 %s50, 1
        %s249 = smul.addr %s248, 128
        %s250 = scalar_lea.vmem [#allocation3], %s249
        %p251 = pneg %p63
        %p252 = pneg %p60
        %p253 = pneg %p91
        %p254 = pneg %p88
        %p255 = pneg %p117
        %p256 = pneg %p114
        %p257 = pneg %p145
        %p258 = pneg %p142
        %s259 = sand.u32 %s132, 1
        %s260 = scalar_lea.sflag [#allocation5], %s259
        %s261 = sand.u32 %s132, 1
        %s262 = smul.addr %s261, 128
        %s263 = scalar_lea.vmem [#allocation9], %s262
        %s264 = smul.u32 32, %s26
        %s265 = smul.u32 16, %s28
        %s266 = smul.u32 32, %s26
        %p267 = scmp.eq.s32.totalorder %s28, 0
        // Predicated region
        $region45: #{tpu_custom_call.1} parent=31 // pred_check
          %p268 = pneg %p267
        $region46: #{tpu_custom_call.1} parent=31 // pred_check_branch
          %270 = sbr.rel (%p268) target = $region48
        $region47: #{tpu_custom_call.1} parent=31 // pred_region
          %271 = vst [vmem:[#allocation2] sm:$0xff] 0.0
          %272 = vst [vmem:[#allocation2 + $0x8] sm:$0xff] 0.0
          %273 = vst [vmem:[#allocation2 + $0x10] sm:$0xff] 0.0
          %274 = vst [vmem:[#allocation2 + $0x18] sm:$0xff] 0.0
          %275 = vst [vmem:[#allocation2 + $0x20] sm:$0xff] 0.0
          %276 = vst [vmem:[#allocation2 + $0x28] sm:$0xff] 0.0
          %277 = vst [vmem:[#allocation2 + $0x30] sm:$0xff] 0.0
          %278 = vst [vmem:[#allocation2 + $0x38] sm:$0xff] 0.0
          %279 = vst [vmem:[#allocation2 + $0x40] sm:$0xff] 0.0
          %280 = vst [vmem:[#allocation2 + $0x48] sm:$0xff] 0.0
          %281 = vst [vmem:[#allocation2 + $0x50] sm:$0xff] 0.0
          %282 = vst [vmem:[#allocation2 + $0x58] sm:$0xff] 0.0
          %283 = vst [vmem:[#allocation2 + $0x60] sm:$0xff] 0.0
          %284 = vst [vmem:[#allocation2 + $0x68] sm:$0xff] 0.0
          %285 = vst [vmem:[#allocation2 + $0x70] sm:$0xff] 0.0
          %286 = vst [vmem:[#allocation2 + $0x78] sm:$0xff] 0.0
          %287 = vst [vmem:[#allocation2 + $0x80] sm:$0xff] 0.0
          %288 = vst [vmem:[#allocation2 + $0x88] sm:$0xff] 0.0
          %289 = vst [vmem:[#allocation2 + $0x90] sm:$0xff] 0.0
          %290 = vst [vmem:[#allocation2 + $0x98] sm:$0xff] 0.0
          %291 = vst [vmem:[#allocation2 + $0xa0] sm:$0xff] 0.0
          %292 = vst [vmem:[#allocation2 + $0xa8] sm:$0xff] 0.0
          %293 = vst [vmem:[#allocation2 + $0xb0] sm:$0xff] 0.0
          %294 = vst [vmem:[#allocation2 + $0xb8] sm:$0xff] 0.0
          %295 = vst [vmem:[#allocation2 + $0xc0] sm:$0xff] 0.0
          %296 = vst [vmem:[#allocation2 + $0xc8] sm:$0xff] 0.0
          %297 = vst [vmem:[#allocation2 + $0xd0] sm:$0xff] 0.0
          %298 = vst [vmem:[#allocation2 + $0xd8] sm:$0xff] 0.0
          %299 = vst [vmem:[#allocation2 + $0xe0] sm:$0xff] 0.0
          %300 = vst [vmem:[#allocation2 + $0xe8] sm:$0xff] 0.0
          %301 = vst [vmem:[#allocation2 + $0xf0] sm:$0xff] 0.0
          %302 = vst [vmem:[#allocation2 + $0xf8] sm:$0xff] 0.0
        $region48: #{tpu_custom_call.1} parent=31 // pred_fallthru
          _
        %v303 = vld [vmem:[#allocation2] sm:$0xff]
        %v304 = vld [vmem:[#allocation2 + $0x8] sm:$0xff]
        %v305 = vld [vmem:[#allocation2 + $0x10] sm:$0xff]
        %v306 = vld [vmem:[#allocation2 + $0x18] sm:$0xff]
        %v307 = vld [vmem:[#allocation2 + $0x20] sm:$0xff]
        %v308 = vld [vmem:[#allocation2 + $0x28] sm:$0xff]
        %v309 = vld [vmem:[#allocation2 + $0x30] sm:$0xff]
        %v310 = vld [vmem:[#allocation2 + $0x38] sm:$0xff]
        %v311 = vld [vmem:[#allocation2 + $0x40] sm:$0xff]
        %v312 = vld [vmem:[#allocation2 + $0x48] sm:$0xff]
        %v313 = vld [vmem:[#allocation2 + $0x50] sm:$0xff]
        %v314 = vld [vmem:[#allocation2 + $0x58] sm:$0xff]
        %v315 = vld [vmem:[#allocation2 + $0x60] sm:$0xff]
        %v316 = vld [vmem:[#allocation2 + $0x68] sm:$0xff]
        %v317 = vld [vmem:[#allocation2 + $0x70] sm:$0xff]
        %v318 = vld [vmem:[#allocation2 + $0x78] sm:$0xff]
        %v319 = vld [vmem:[#allocation2 + $0x80] sm:$0xff]
        %v320 = vld [vmem:[#allocation2 + $0x88] sm:$0xff]
        %v321 = vld [vmem:[#allocation2 + $0x90] sm:$0xff]
        %v322 = vld [vmem:[#allocation2 + $0x98] sm:$0xff]
        %v323 = vld [vmem:[#allocation2 + $0xa0] sm:$0xff]
        %v324 = vld [vmem:[#allocation2 + $0xa8] sm:$0xff]
        %v325 = vld [vmem:[#allocation2 + $0xb0] sm:$0xff]
        %v326 = vld [vmem:[#allocation2 + $0xb8] sm:$0xff]
        %v327 = vld [vmem:[#allocation2 + $0xc0] sm:$0xff]
        %v328 = vld [vmem:[#allocation2 + $0xc8] sm:$0xff]
        %v329 = vld [vmem:[#allocation2 + $0xd0] sm:$0xff]
        %v330 = vld [vmem:[#allocation2 + $0xd8] sm:$0xff]
        %v331 = vld [vmem:[#allocation2 + $0xe0] sm:$0xff]
        %v332 = vld [vmem:[#allocation2 + $0xe8] sm:$0xff]
        %v333 = vld [vmem:[#allocation2 + $0xf0] sm:$0xff]
        %v334 = vld [vmem:[#allocation2 + $0xf8] sm:$0xff]
        %v335 = vld [vmem:[%s230] sm:$0xf]
        %v336 = vld [vmem:[%s230 + $0x4] sm:$0xf]
        %v337 = vld [vmem:[%s230 + $0x8] sm:$0xf]
        %v338 = vld [vmem:[%s230 + $0xc] sm:$0xf]
        %v339 = vld [vmem:[%s230 + $0x10] sm:$0xf]
        %v340 = vld [vmem:[%s230 + $0x14] sm:$0xf]
        %v341 = vld [vmem:[%s230 + $0x18] sm:$0xf]
        %v342 = vld [vmem:[%s230 + $0x1c] sm:$0xf]
        %v343 = vld [vmem:[%s230 + $0x20] sm:$0xf]
        %v344 = vld [vmem:[%s230 + $0x24] sm:$0xf]
        %v345 = vld [vmem:[%s230 + $0x28] sm:$0xf]
        %v346 = vld [vmem:[%s230 + $0x2c] sm:$0xf]
        %v347 = vld [vmem:[%s230 + $0x30] sm:$0xf]
        %v348 = vld [vmem:[%s230 + $0x34] sm:$0xf]
        %v349 = vld [vmem:[%s230 + $0x38] sm:$0xf]
        %v350 = vld [vmem:[%s230 + $0x3c] sm:$0xf]
        %v351 = vld [vmem:[%s230 + $0x40] sm:$0xf]
        %v352 = vld [vmem:[%s230 + $0x44] sm:$0xf]
        %v353 = vld [vmem:[%s230 + $0x48] sm:$0xf]
        %v354 = vld [vmem:[%s230 + $0x4c] sm:$0xf]
        %v355 = vld [vmem:[%s230 + $0x50] sm:$0xf]
        %v356 = vld [vmem:[%s230 + $0x54] sm:$0xf]
        %v357 = vld [vmem:[%s230 + $0x58] sm:$0xf]
        %v358 = vld [vmem:[%s230 + $0x5c] sm:$0xf]
        %v359 = vld [vmem:[%s230 + $0x60] sm:$0xf]
        %v360 = vld [vmem:[%s230 + $0x64] sm:$0xf]
        %v361 = vld [vmem:[%s230 + $0x68] sm:$0xf]
        %v362 = vld [vmem:[%s230 + $0x6c] sm:$0xf]
        %v363 = vld [vmem:[%s230 + $0x70] sm:$0xf]
        %v364 = vld [vmem:[%s230 + $0x74] sm:$0xf]
        %v365 = vld [vmem:[%s230 + $0x78] sm:$0xf]
        %v366 = vld [vmem:[%s230 + $0x7c] sm:$0xf]
        %v367 = vld [vmem:[#allocation6] sm:$0xf]
        %v368 = vld [vmem:[#allocation6 + $0x4] sm:$0xf]
        %v369 = vld [vmem:[#allocation6 + $0x8] sm:$0xf]
        %v370 = vld [vmem:[#allocation6 + $0xc] sm:$0xf]
        %v371 = vld [vmem:[#allocation6 + $0x10] sm:$0xf]
        %v372 = vld [vmem:[#allocation6 + $0x14] sm:$0xf]
        %v373 = vld [vmem:[#allocation6 + $0x18] sm:$0xf]
        %v374 = vld [vmem:[#allocation6 + $0x1c] sm:$0xf]
        %v375 = vld [vmem:[#allocation6 + $0x20] sm:$0xf]
        %v376 = vld [vmem:[#allocation6 + $0x24] sm:$0xf]
        %v377 = vld [vmem:[#allocation6 + $0x28] sm:$0xf]
        %v378 = vld [vmem:[#allocation6 + $0x2c] sm:$0xf]
        %v379 = vld [vmem:[#allocation6 + $0x30] sm:$0xf]
        %v380 = vld [vmem:[#allocation6 + $0x34] sm:$0xf]
        %v381 = vld [vmem:[#allocation6 + $0x38] sm:$0xf]
        %v382 = vld [vmem:[#allocation6 + $0x3c] sm:$0xf]
        %v415 = vunpack.c.l.b16 %v335
        %v416 = vunpack.c.l.b16 %v336
        %v417 = vunpack.c.l.b16 %v337
        %v418 = vunpack.c.l.b16 %v338
        %v419 = vunpack.c.l.b16 %v339
        %v420 = vunpack.c.l.b16 %v340
        %v421 = vunpack.c.l.b16 %v341
        %v422 = vunpack.c.l.b16 %v342
        %v423 = vunpack.c.l.b16 %v343
        %v424 = vunpack.c.l.b16 %v344
        %v425 = vunpack.c.l.b16 %v345
        %v426 = vunpack.c.l.b16 %v346
        %v427 = vunpack.c.l.b16 %v347
        %v428 = vunpack.c.l.b16 %v348
        %v429 = vunpack.c.l.b16 %v349
        %v430 = vunpack.c.l.b16 %v350
        %v431 = vunpack.c.l.b16 %v351
        %v432 = vunpack.c.l.b16 %v352
        %v433 = vunpack.c.l.b16 %v353
        %v434 = vunpack.c.l.b16 %v354
        %v435 = vunpack.c.l.b16 %v355
        %v436 = vunpack.c.l.b16 %v356
        %v437 = vunpack.c.l.b16 %v357
        %v438 = vunpack.c.l.b16 %v358
        %v439 = vunpack.c.l.b16 %v359
        %v440 = vunpack.c.l.b16 %v360
        %v441 = vunpack.c.l.b16 %v361
        %v442 = vunpack.c.l.b16 %v362
        %v443 = vunpack.c.l.b16 %v363
        %v444 = vunpack.c.l.b16 %v364
        %v445 = vunpack.c.l.b16 %v365
        %v446 = vunpack.c.l.b16 %v366
        %v447 = vpack.c.b16 %v416, %v415
        %v448 = vpack.c.b16 %v418, %v417
        %v449 = vpack.c.b16 %v420, %v419
        %v450 = vpack.c.b16 %v422, %v421
        %v451 = vpack.c.b16 %v424, %v423
        %v452 = vpack.c.b16 %v426, %v425
        %v453 = vpack.c.b16 %v428, %v427
        %v454 = vpack.c.b16 %v430, %v429
        %v455 = vpack.c.b16 %v432, %v431
        %v456 = vpack.c.b16 %v434, %v433
        %v457 = vpack.c.b16 %v436, %v435
        %v458 = vpack.c.b16 %v438, %v437
        %v459 = vpack.c.b16 %v440, %v439
        %v460 = vpack.c.b16 %v442, %v441
        %v461 = vpack.c.b16 %v444, %v443
        %v462 = vpack.c.b16 %v446, %v445
        %v495 = vunpack.c.l.b16 %v367
        %v496 = vunpack.c.l.b16 %v368
        %v497 = vunpack.c.l.b16 %v369
        %v498 = vunpack.c.l.b16 %v370
        %v499 = vunpack.c.l.b16 %v371
        %v500 = vunpack.c.l.b16 %v372
        %v501 = vunpack.c.l.b16 %v373
        %v502 = vunpack.c.l.b16 %v374
        %v503 = vunpack.c.l.b16 %v375
        %v504 = vunpack.c.l.b16 %v376
        %v505 = vunpack.c.l.b16 %v377
        %v506 = vunpack.c.l.b16 %v378
        %v507 = vunpack.c.l.b16 %v379
        %v508 = vunpack.c.l.b16 %v380
        %v509 = vunpack.c.l.b16 %v381
        %v510 = vunpack.c.l.b16 %v382
        %v511 = vpack.c.b16 %v496, %v495
        %v512 = vpack.c.b16 %v498, %v497
        %v513 = vpack.c.b16 %v500, %v499
        %v514 = vpack.c.b16 %v502, %v501
        %v515 = vpack.c.b16 %v504, %v503
        %v516 = vpack.c.b16 %v506, %v505
        %v517 = vpack.c.b16 %v508, %v507
        %v518 = vpack.c.b16 %v510, %v509
        %527 = vmatpush.bf16.msra.mxu0 %v518
        %528 = vmatpush.bf16.msra.mxu0 %v517
        %529 = vmatpush.bf16.msra.mxu0 %v516
        %530 = vmatpush.bf16.msra.mxu0 %v515
        %531 = vmatpush.bf16.msra.mxu0 %v514
        %532 = vmatpush.bf16.msra.mxu0 %v513
        %533 = vmatpush.bf16.msra.mxu0 %v512
        %534 = vmatpush.bf16.msra.mxu0 %v511
        %535 = vmatmul.bf16.gmra.mxu0 %v447
        %v536 = vpop.f32.mrf.mxu0
        %v537 = vadd.f32 0.0, %v536
        %v538 = vpop.f32.mrf.mxu0
        %v539 = vadd.f32 0.0, %v538
        %540 = vmatmul.bf16.gmra.mxu0 %v448
        %v541 = vpop.f32.mrf.mxu0
        %v542 = vadd.f32 0.0, %v541
        %v543 = vpop.f32.mrf.mxu0
        %v544 = vadd.f32 0.0, %v543
        %545 = vmatmul.bf16.gmra.mxu0 %v449
        %v546 = vpop.f32.mrf.mxu0
        %v547 = vadd.f32 0.0, %v546
        %v548 = vpop.f32.mrf.mxu0
        %v549 = vadd.f32 0.0, %v548
        %550 = vmatmul.bf16.gmra.mxu0 %v450
        %v551 = vpop.f32.mrf.mxu0
        %v552 = vadd.f32 0.0, %v551
        %v553 = vpop.f32.mrf.mxu0
        %v554 = vadd.f32 0.0, %v553
        %555 = vmatmul.bf16.gmra.mxu0 %v451
        %v556 = vpop.f32.mrf.mxu0
        %v557 = vadd.f32 0.0, %v556
        %v558 = vpop.f32.mrf.mxu0
        %v559 = vadd.f32 0.0, %v558
        %560 = vmatmul.bf16.gmra.mxu0 %v452
        %v561 = vpop.f32.mrf.mxu0
        %v562 = vadd.f32 0.0, %v561
        %v563 = vpop.f32.mrf.mxu0
        %v564 = vadd.f32 0.0, %v563
        %565 = vmatmul.bf16.gmra.mxu0 %v453
        %v566 = vpop.f32.mrf.mxu0
        %v567 = vadd.f32 0.0, %v566
        %v568 = vpop.f32.mrf.mxu0
        %v569 = vadd.f32 0.0, %v568
        %570 = vmatmul.bf16.gmra.mxu0 %v454
        %v571 = vpop.f32.mrf.mxu0
        %v572 = vadd.f32 0.0, %v571
        %v573 = vpop.f32.mrf.mxu0
        %v574 = vadd.f32 0.0, %v573
        %575 = vmatmul.bf16.gmra.mxu0 %v455
        %v576 = vpop.f32.mrf.mxu0
        %v577 = vadd.f32 0.0, %v576
        %v578 = vpop.f32.mrf.mxu0
        %v579 = vadd.f32 0.0, %v578
        %580 = vmatmul.bf16.gmra.mxu0 %v456
        %v581 = vpop.f32.mrf.mxu0
        %v582 = vadd.f32 0.0, %v581
        %v583 = vpop.f32.mrf.mxu0
        %v584 = vadd.f32 0.0, %v583
        %585 = vmatmul.bf16.gmra.mxu0 %v457
        %v586 = vpop.f32.mrf.mxu0
        %v587 = vadd.f32 0.0, %v586
        %v588 = vpop.f32.mrf.mxu0
        %v589 = vadd.f32 0.0, %v588
        %590 = vmatmul.bf16.gmra.mxu0 %v458
        %v591 = vpop.f32.mrf.mxu0
        %v592 = vadd.f32 0.0, %v591
        %v593 = vpop.f32.mrf.mxu0
        %v594 = vadd.f32 0.0, %v593
        %595 = vmatmul.bf16.gmra.mxu0 %v459
        %v596 = vpop.f32.mrf.mxu0
        %v597 = vadd.f32 0.0, %v596
        %v598 = vpop.f32.mrf.mxu0
        %v599 = vadd.f32 0.0, %v598
        %600 = vmatmul.bf16.gmra.mxu0 %v460
        %v601 = vpop.f32.mrf.mxu0
        %v602 = vadd.f32 0.0, %v601
        %v603 = vpop.f32.mrf.mxu0
        %v604 = vadd.f32 0.0, %v603
        %605 = vmatmul.bf16.gmra.mxu0 %v461
        %v606 = vpop.f32.mrf.mxu0
        %v607 = vadd.f32 0.0, %v606
        %v608 = vpop.f32.mrf.mxu0
        %v609 = vadd.f32 0.0, %v608
        %610 = vmatmul.bf16.gmra.mxu0 %v462
        %v611 = vpop.f32.mrf.mxu0
        %v612 = vadd.f32 0.0, %v611
        %v613 = vpop.f32.mrf.mxu0
        %v614 = vadd.f32 0.0, %v613
        %615 = vdwg.mxu0
        %v616 = vadd.f32 %v303, %v537
        %v617 = vadd.f32 %v304, %v539
        %v618 = vadd.f32 %v305, %v542
        %v619 = vadd.f32 %v306, %v544
        %v620 = vadd.f32 %v307, %v547
        %v621 = vadd.f32 %v308, %v549
        %v622 = vadd.f32 %v309, %v552
        %v623 = vadd.f32 %v310, %v554
        %v624 = vadd.f32 %v311, %v557
        %v625 = vadd.f32 %v312, %v559
        %v626 = vadd.f32 %v313, %v562
        %v627 = vadd.f32 %v314, %v564
        %v628 = vadd.f32 %v315, %v567
        %v629 = vadd.f32 %v316, %v569
        %v630 = vadd.f32 %v317, %v572
        %v631 = vadd.f32 %v318, %v574
        %v632 = vadd.f32 %v319, %v577
        %v633 = vadd.f32 %v320, %v579
        %v634 = vadd.f32 %v321, %v582
        %v635 = vadd.f32 %v322, %v584
        %v636 = vadd.f32 %v323, %v587
        %v637 = vadd.f32 %v324, %v589
        %v638 = vadd.f32 %v325, %v592
        %v639 = vadd.f32 %v326, %v594
        %v640 = vadd.f32 %v327, %v597
        %v641 = vadd.f32 %v328, %v599
        %v642 = vadd.f32 %v329, %v602
        %v643 = vadd.f32 %v330, %v604
        %v644 = vadd.f32 %v331, %v607
        %v645 = vadd.f32 %v332, %v609
        %v646 = vadd.f32 %v333, %v612
        %v647 = vadd.f32 %v334, %v614
        %648 = vst [vmem:[#allocation2] sm:$0xff] %v616
        %649 = vst [vmem:[#allocation2 + $0x8] sm:$0xff] %v617
        %650 = vst [vmem:[#allocation2 + $0x10] sm:$0xff] %v618
        %651 = vst [vmem:[#allocation2 + $0x18] sm:$0xff] %v619
        %652 = vst [vmem:[#allocation2 + $0x20] sm:$0xff] %v620
        %653 = vst [vmem:[#allocation2 + $0x28] sm:$0xff] %v621
        %654 = vst [vmem:[#allocation2 + $0x30] sm:$0xff] %v622
        %655 = vst [vmem:[#allocation2 + $0x38] sm:$0xff] %v623
        %656 = vst [vmem:[#allocation2 + $0x40] sm:$0xff] %v624
        %657 = vst [vmem:[#allocation2 + $0x48] sm:$0xff] %v625
        %658 = vst [vmem:[#allocation2 + $0x50] sm:$0xff] %v626
        %659 = vst [vmem:[#allocation2 + $0x58] sm:$0xff] %v627
        %660 = vst [vmem:[#allocation2 + $0x60] sm:$0xff] %v628
        %661 = vst [vmem:[#allocation2 + $0x68] sm:$0xff] %v629
        %662 = vst [vmem:[#allocation2 + $0x70] sm:$0xff] %v630
        %663 = vst [vmem:[#allocation2 + $0x78] sm:$0xff] %v631
        %664 = vst [vmem:[#allocation2 + $0x80] sm:$0xff] %v632
        %665 = vst [vmem:[#allocation2 + $0x88] sm:$0xff] %v633
        %666 = vst [vmem:[#allocation2 + $0x90] sm:$0xff] %v634
        %667 = vst [vmem:[#allocation2 + $0x98] sm:$0xff] %v635
        %668 = vst [vmem:[#allocation2 + $0xa0] sm:$0xff] %v636
        %669 = vst [vmem:[#allocation2 + $0xa8] sm:$0xff] %v637
        %670 = vst [vmem:[#allocation2 + $0xb0] sm:$0xff] %v638
        %671 = vst [vmem:[#allocation2 + $0xb8] sm:$0xff] %v639
        %672 = vst [vmem:[#allocation2 + $0xc0] sm:$0xff] %v640
        %673 = vst [vmem:[#allocation2 + $0xc8] sm:$0xff] %v641
        %674 = vst [vmem:[#allocation2 + $0xd0] sm:$0xff] %v642
        %675 = vst [vmem:[#allocation2 + $0xd8] sm:$0xff] %v643
        %676 = vst [vmem:[#allocation2 + $0xe0] sm:$0xff] %v644
        %677 = vst [vmem:[#allocation2 + $0xe8] sm:$0xff] %v645
        %678 = vst [vmem:[#allocation2 + $0xf0] sm:$0xff] %v646
        %679 = vst [vmem:[#allocation2 + $0xf8] sm:$0xff] %v647
        // Predicated region
        $region49: #{tpu_custom_call.1} parent=31 // pred_check
          %p680 = pneg %p267
        $region50: #{tpu_custom_call.1} parent=31 // pred_check_branch
          %682 = sbr.rel (%p680) target = $region52
        $region51: #{tpu_custom_call.1} parent=31 // pred_region
          %v683 = vld [vmem:[#allocation2] sm:$0xff]
          %v684 = vld [vmem:[#allocation2 + $0x8] sm:$0xff]
          %v685 = vld [vmem:[#allocation2 + $0x10] sm:$0xff]
          %v686 = vld [vmem:[#allocation2 + $0x18] sm:$0xff]
          %v687 = vld [vmem:[#allocation2 + $0x20] sm:$0xff]
          %v688 = vld [vmem:[#allocation2 + $0x28] sm:$0xff]
          %v689 = vld [vmem:[#allocation2 + $0x30] sm:$0xff]
          %v690 = vld [vmem:[#allocation2 + $0x38] sm:$0xff]
          %v691 = vld [vmem:[#allocation2 + $0x40] sm:$0xff]
          %v692 = vld [vmem:[#allocation2 + $0x48] sm:$0xff]
          %v693 = vld [vmem:[#allocation2 + $0x50] sm:$0xff]
          %v694 = vld [vmem:[#allocation2 + $0x58] sm:$0xff]
          %v695 = vld [vmem:[#allocation2 + $0x60] sm:$0xff]
          %v696 = vld [vmem:[#allocation2 + $0x68] sm:$0xff]
          %v697 = vld [vmem:[#allocation2 + $0x70] sm:$0xff]
          %v698 = vld [vmem:[#allocation2 + $0x78] sm:$0xff]
          %v699 = vld [vmem:[#allocation2 + $0x80] sm:$0xff]
          %v700 = vld [vmem:[#allocation2 + $0x88] sm:$0xff]
          %v701 = vld [vmem:[#allocation2 + $0x90] sm:$0xff]
          %v702 = vld [vmem:[#allocation2 + $0x98] sm:$0xff]
          %v703 = vld [vmem:[#allocation2 + $0xa0] sm:$0xff]
          %v704 = vld [vmem:[#allocation2 + $0xa8] sm:$0xff]
          %v705 = vld [vmem:[#allocation2 + $0xb0] sm:$0xff]
          %v706 = vld [vmem:[#allocation2 + $0xb8] sm:$0xff]
          %v707 = vld [vmem:[#allocation2 + $0xc0] sm:$0xff]
          %v708 = vld [vmem:[#allocation2 + $0xc8] sm:$0xff]
          %v709 = vld [vmem:[#allocation2 + $0xd0] sm:$0xff]
          %v710 = vld [vmem:[#allocation2 + $0xd8] sm:$0xff]
          %v711 = vld [vmem:[#allocation2 + $0xe0] sm:$0xff]
          %v712 = vld [vmem:[#allocation2 + $0xe8] sm:$0xff]
          %v713 = vld [vmem:[#allocation2 + $0xf0] sm:$0xff]
          %v714 = vld [vmem:[#allocation2 + $0xf8] sm:$0xff]
          %v715 = vld [vmem:[#allocation8] sm:$0x1]
          %v716 = vperm.slane %v715, 0
          %v717 = vmul.f32 %v683, %v716
          %v718 = vmul.f32 %v684, %v716
          %v719 = vmul.f32 %v685, %v716
          %v720 = vmul.f32 %v686, %v716
          %v721 = vmul.f32 %v687, %v716
          %v722 = vmul.f32 %v688, %v716
          %v723 = vmul.f32 %v689, %v716
          %v724 = vmul.f32 %v690, %v716
          %v725 = vmul.f32 %v691, %v716
          %v726 = vmul.f32 %v692, %v716
          %v727 = vmul.f32 %v693, %v716
          %v728 = vmul.f32 %v694, %v716
          %v729 = vmul.f32 %v695, %v716
          %v730 = vmul.f32 %v696, %v716
          %v731 = vmul.f32 %v697, %v716
          %v732 = vmul.f32 %v698, %v716
          %v733 = vmul.f32 %v699, %v716
          %v734 = vmul.f32 %v700, %v716
          %v735 = vmul.f32 %v701, %v716
          %v736 = vmul.f32 %v702, %v716
          %v737 = vmul.f32 %v703, %v716
          %v738 = vmul.f32 %v704, %v716
          %v739 = vmul.f32 %v705, %v716
          %v740 = vmul.f32 %v706, %v716
          %v741 = vmul.f32 %v707, %v716
          %v742 = vmul.f32 %v708, %v716
          %v743 = vmul.f32 %v709, %v716
          %v744 = vmul.f32 %v710, %v716
          %v745 = vmul.f32 %v711, %v716
          %v746 = vmul.f32 %v712, %v716
          %v747 = vmul.f32 %v713, %v716
          %v748 = vmul.f32 %v714, %v716
          %v749 = vld [vmem:[#allocation8 + $0x1] sm:$0x1]
          %v750 = vperm.slane %v749, 0
          %v751 = vadd.f32 %v717, %v750
          %v752 = vadd.f32 %v718, %v750
          %v753 = vadd.f32 %v719, %v750
          %v754 = vadd.f32 %v720, %v750
          %v755 = vadd.f32 %v721, %v750
          %v756 = vadd.f32 %v722, %v750
          %v757 = vadd.f32 %v723, %v750
          %v758 = vadd.f32 %v724, %v750
          %v759 = vadd.f32 %v725, %v750
          %v760 = vadd.f32 %v726, %v750
          %v761 = vadd.f32 %v727, %v750
          %v762 = vadd.f32 %v728, %v750
          %v763 = vadd.f32 %v729, %v750
          %v764 = vadd.f32 %v730, %v750
          %v765 = vadd.f32 %v731, %v750
          %v766 = vadd.f32 %v732, %v750
          %v767 = vadd.f32 %v733, %v750
          %v768 = vadd.f32 %v734, %v750
          %v769 = vadd.f32 %v735, %v750
          %v770 = vadd.f32 %v736, %v750
          %v771 = vadd.f32 %v737, %v750
          %v772 = vadd.f32 %v738, %v750
          %v773 = vadd.f32 %v739, %v750
          %v774 = vadd.f32 %v740, %v750
          %v775 = vadd.f32 %v741, %v750
          %v776 = vadd.f32 %v742, %v750
          %v777 = vadd.f32 %v743, %v750
          %v778 = vadd.f32 %v744, %v750
          %v779 = vadd.f32 %v745, %v750
          %v780 = vadd.f32 %v746, %v750
          %v781 = vadd.f32 %v747, %v750
          %v782 = vadd.f32 %v748, %v750
          %v783 = vxor.u32 %v751, 2147483648
          %v784 = vxor.u32 %v752, 2147483648
          %v785 = vxor.u32 %v753, 2147483648
          %v786 = vxor.u32 %v754, 2147483648
          %v787 = vxor.u32 %v755, 2147483648
          %v788 = vxor.u32 %v756, 2147483648
          %v789 = vxor.u32 %v757, 2147483648
          %v790 = vxor.u32 %v758, 2147483648
          %v791 = vxor.u32 %v759, 2147483648
          %v792 = vxor.u32 %v760, 2147483648
          %v793 = vxor.u32 %v761, 2147483648
          %v794 = vxor.u32 %v762, 2147483648
          %v795 = vxor.u32 %v763, 2147483648
          %v796 = vxor.u32 %v764, 2147483648
          %v797 = vxor.u32 %v765, 2147483648
          %v798 = vxor.u32 %v766, 2147483648
          %v799 = vxor.u32 %v767, 2147483648
          %v800 = vxor.u32 %v768, 2147483648
          %v801 = vxor.u32 %v769, 2147483648
          %v802 = vxor.u32 %v770, 2147483648
          %v803 = vxor.u32 %v771, 2147483648
          %v804 = vxor.u32 %v772, 2147483648
          %v805 = vxor.u32 %v773, 2147483648
          %v806 = vxor.u32 %v774, 2147483648
          %v807 = vxor.u32 %v775, 2147483648
          %v808 = vxor.u32 %v776, 2147483648
          %v809 = vxor.u32 %v777, 2147483648
          %v810 = vxor.u32 %v778, 2147483648
          %v811 = vxor.u32 %v779, 2147483648
          %v812 = vxor.u32 %v780, 2147483648
          %v813 = vxor.u32 %v781, 2147483648
          %v814 = vxor.u32 %v782, 2147483648
          %v815 = vmul.f32 %v783, 1.442695
          %v816 = vpow.pop %v815
          %v817 = vmul.f32 %v784, 1.442695
          %v818 = vpow.pop %v817
          %v819 = vmul.f32 %v785, 1.442695
          %v820 = vpow.pop %v819
          %v821 = vmul.f32 %v786, 1.442695
          %v822 = vpow.pop %v821
          %v823 = vmul.f32 %v787, 1.442695
          %v824 = vpow.pop %v823
          %v825 = vmul.f32 %v788, 1.442695
          %v826 = vpow.pop %v825
          %v827 = vmul.f32 %v789, 1.442695
          %v828 = vpow.pop %v827
          %v829 = vmul.f32 %v790, 1.442695
          %v830 = vpow.pop %v829
          %v831 = vmul.f32 %v791, 1.442695
          %v832 = vpow.pop %v831
          %v833 = vmul.f32 %v792, 1.442695
          %v834 = vpow.pop %v833
          %v835 = vmul.f32 %v793, 1.442695
          %v836 = vpow.pop %v835
          %v837 = vmul.f32 %v794, 1.442695
          %v838 = vpow.pop %v837
          %v839 = vmul.f32 %v795, 1.442695
          %v840 = vpow.pop %v839
          %v841 = vmul.f32 %v796, 1.442695
          %v842 = vpow.pop %v841
          %v843 = vmul.f32 %v797, 1.442695
          %v844 = vpow.pop %v843
          %v845 = vmul.f32 %v798, 1.442695
          %v846 = vpow.pop %v845
          %v847 = vmul.f32 %v799, 1.442695
          %v848 = vpow.pop %v847
          %v849 = vmul.f32 %v800, 1.442695
          %v850 = vpow.pop %v849
          %v851 = vmul.f32 %v801, 1.442695
          %v852 = vpow.pop %v851
          %v853 = vmul.f32 %v802, 1.442695
          %v854 = vpow.pop %v853
          %v855 = vmul.f32 %v803, 1.442695
          %v856 = vpow.pop %v855
          %v857 = vmul.f32 %v804, 1.442695
          %v858 = vpow.pop %v857
          %v859 = vmul.f32 %v805, 1.442695
          %v860 = vpow.pop %v859
          %v861 = vmul.f32 %v806, 1.442695
          %v862 = vpow.pop %v861
          %v863 = vmul.f32 %v807, 1.442695
          %v864 = vpow.pop %v863
          %v865 = vmul.f32 %v808, 1.442695
          %v866 = vpow.pop %v865
          %v867 = vmul.f32 %v809, 1.442695
          %v868 = vpow.pop %v867
          %v869 = vmul.f32 %v810, 1.442695
          %v870 = vpow.pop %v869
          %v871 = vmul.f32 %v811, 1.442695
          %v872 = vpow.pop %v871
          %v873 = vmul.f32 %v812, 1.442695
          %v874 = vpow.pop %v873
          %v875 = vmul.f32 %v813, 1.442695
          %v876 = vpow.pop %v875
          %v877 = vmul.f32 %v814, 1.442695
          %v878 = vpow.pop %v877
          %v879 = vadd.f32 %v816, 1.0
          %v880 = vadd.f32 %v818, 1.0
          %v881 = vadd.f32 %v820, 1.0
          %v882 = vadd.f32 %v822, 1.0
          %v883 = vadd.f32 %v824, 1.0
          %v884 = vadd.f32 %v826, 1.0
          %v885 = vadd.f32 %v828, 1.0
          %v886 = vadd.f32 %v830, 1.0
          %v887 = vadd.f32 %v832, 1.0
          %v888 = vadd.f32 %v834, 1.0
          %v889 = vadd.f32 %v836, 1.0
          %v890 = vadd.f32 %v838, 1.0
          %v891 = vadd.f32 %v840, 1.0
          %v892 = vadd.f32 %v842, 1.0
          %v893 = vadd.f32 %v844, 1.0
          %v894 = vadd.f32 %v846, 1.0
          %v895 = vadd.f32 %v848, 1.0
          %v896 = vadd.f32 %v850, 1.0
          %v897 = vadd.f32 %v852, 1.0
          %v898 = vadd.f32 %v854, 1.0
          %v899 = vadd.f32 %v856, 1.0
          %v900 = vadd.f32 %v858, 1.0
          %v901 = vadd.f32 %v860, 1.0
          %v902 = vadd.f32 %v862, 1.0
          %v903 = vadd.f32 %v864, 1.0
          %v904 = vadd.f32 %v866, 1.0
          %v905 = vadd.f32 %v868, 1.0
          %v906 = vadd.f32 %v870, 1.0
          %v907 = vadd.f32 %v872, 1.0
          %v908 = vadd.f32 %v874, 1.0
          %v909 = vadd.f32 %v876, 1.0
          %v910 = vadd.f32 %v878, 1.0
          %v911 = vrcp.pop %v879
          %v912 = vmul.f32 %v879, %v911
          %v913 = vsub.f32 1.0, %v912
          %v914 = vmul.f32 %v911, %v913
          %v915 = vadd.f32 %v911, %v914
          %vm916 = vweird.f32 %v879
          %vm917 = vweird.f32 %v911
          %vm918 = vmor %vm916, %vm917
          %v919 = vsel %vm918, %v911, %v915
          %v920 = vand.u32 2147483647, %v879
          %vm921 = vcmp.eq.f32.partialorder %v920, 8.507059e+37
          %v922 = vand.u32 %v879, 2147483648
          %v923 = vor.u32 1.1754944e-38, %v922
          %v924 = vsel %vm921, %v923, %v919
          %v925 = vmul.f32 1.0, %v924
          %v926 = vrcp.pop %v880
          %v927 = vmul.f32 %v880, %v926
          %v928 = vsub.f32 1.0, %v927
          %v929 = vmul.f32 %v926, %v928
          %v930 = vadd.f32 %v926, %v929
          %vm931 = vweird.f32 %v880
          %vm932 = vweird.f32 %v926
          %vm933 = vmor %vm931, %vm932
          %v934 = vsel %vm933, %v926, %v930
          %v935 = vand.u32 2147483647, %v880
          %vm936 = vcmp.eq.f32.partialorder %v935, 8.507059e+37
          %v937 = vand.u32 %v880, 2147483648
          %v938 = vor.u32 1.1754944e-38, %v937
          %v939 = vsel %vm936, %v938, %v934
          %v940 = vmul.f32 1.0, %v939
          %v941 = vrcp.pop %v881
          %v942 = vmul.f32 %v881, %v941
          %v943 = vsub.f32 1.0, %v942
          %v944 = vmul.f32 %v941, %v943
          %v945 = vadd.f32 %v941, %v944
          %vm946 = vweird.f32 %v881
          %vm947 = vweird.f32 %v941
          %vm948 = vmor %vm946, %vm947
          %v949 = vsel %vm948, %v941, %v945
          %v950 = vand.u32 2147483647, %v881
          %vm951 = vcmp.eq.f32.partialorder %v950, 8.507059e+37
          %v952 = vand.u32 %v881, 2147483648
          %v953 = vor.u32 1.1754944e-38, %v952
          %v954 = vsel %vm951, %v953, %v949
          %v955 = vmul.f32 1.0, %v954
          %v956 = vrcp.pop %v882
          %v957 = vmul.f32 %v882, %v956
          %v958 = vsub.f32 1.0, %v957
          %v959 = vmul.f32 %v956, %v958
          %v960 = vadd.f32 %v956, %v959
          %vm961 = vweird.f32 %v882
          %vm962 = vweird.f32 %v956
          %vm963 = vmor %vm961, %vm962
          %v964 = vsel %vm963, %v956, %v960
          %v965 = vand.u32 2147483647, %v882
          %vm966 = vcmp.eq.f32.partialorder %v965, 8.507059e+37
          %v967 = vand.u32 %v882, 2147483648
          %v968 = vor.u32 1.1754944e-38, %v967
          %v969 = vsel %vm966, %v968, %v964
          %v970 = vmul.f32 1.0, %v969
          %v971 = vrcp.pop %v883
          %v972 = vmul.f32 %v883, %v971
          %v973 = vsub.f32 1.0, %v972
          %v974 = vmul.f32 %v971, %v973
          %v975 = vadd.f32 %v971, %v974
          %vm976 = vweird.f32 %v883
          %vm977 = vweird.f32 %v971
          %vm978 = vmor %vm976, %vm977
          %v979 = vsel %vm978, %v971, %v975
          %v980 = vand.u32 2147483647, %v883
          %vm981 = vcmp.eq.f32.partialorder %v980, 8.507059e+37
          %v982 = vand.u32 %v883, 2147483648
          %v983 = vor.u32 1.1754944e-38, %v982
          %v984 = vsel %vm981, %v983, %v979
          %v985 = vmul.f32 1.0, %v984
          %v986 = vrcp.pop %v884
          %v987 = vmul.f32 %v884, %v986
          %v988 = vsub.f32 1.0, %v987
          %v989 = vmul.f32 %v986, %v988
          %v990 = vadd.f32 %v986, %v989
          %vm991 = vweird.f32 %v884
          %vm992 = vweird.f32 %v986
          %vm993 = vmor %vm991, %vm992
          %v994 = vsel %vm993, %v986, %v990
          %v995 = vand.u32 2147483647, %v884
          %vm996 = vcmp.eq.f32.partialorder %v995, 8.507059e+37
          %v997 = vand.u32 %v884, 2147483648
          %v998 = vor.u32 1.1754944e-38, %v997
          %v999 = vsel %vm996, %v998, %v994
          %v1000 = vmul.f32 1.0, %v999
          %v1001 = vrcp.pop %v885
          %v1002 = vmul.f32 %v885, %v1001
          %v1003 = vsub.f32 1.0, %v1002
          %v1004 = vmul.f32 %v1001, %v1003
          %v1005 = vadd.f32 %v1001, %v1004
          %vm1006 = vweird.f32 %v885
          %vm1007 = vweird.f32 %v1001
          %vm1008 = vmor %vm1006, %vm1007
          %v1009 = vsel %vm1008, %v1001, %v1005
          %v1010 = vand.u32 2147483647, %v885
          %vm1011 = vcmp.eq.f32.partialorder %v1010, 8.507059e+37
          %v1012 = vand.u32 %v885, 2147483648
          %v1013 = vor.u32 1.1754944e-38, %v1012
          %v1014 = vsel %vm1011, %v1013, %v1009
          %v1015 = vmul.f32 1.0, %v1014
          %v1016 = vrcp.pop %v886
          %v1017 = vmul.f32 %v886, %v1016
          %v1018 = vsub.f32 1.0, %v1017
          %v1019 = vmul.f32 %v1016, %v1018
          %v1020 = vadd.f32 %v1016, %v1019
          %vm1021 = vweird.f32 %v886
          %vm1022 = vweird.f32 %v1016
          %vm1023 = vmor %vm1021, %vm1022
          %v1024 = vsel %vm1023, %v1016, %v1020
          %v1025 = vand.u32 2147483647, %v886
          %vm1026 = vcmp.eq.f32.partialorder %v1025, 8.507059e+37
          %v1027 = vand.u32 %v886, 2147483648
          %v1028 = vor.u32 1.1754944e-38, %v1027
          %v1029 = vsel %vm1026, %v1028, %v1024
          %v1030 = vmul.f32 1.0, %v1029
          %v1031 = vrcp.pop %v887
          %v1032 = vmul.f32 %v887, %v1031
          %v1033 = vsub.f32 1.0, %v1032
          %v1034 = vmul.f32 %v1031, %v1033
          %v1035 = vadd.f32 %v1031, %v1034
          %vm1036 = vweird.f32 %v887
          %vm1037 = vweird.f32 %v1031
          %vm1038 = vmor %vm1036, %vm1037
          %v1039 = vsel %vm1038, %v1031, %v1035
          %v1040 = vand.u32 2147483647, %v887
          %vm1041 = vcmp.eq.f32.partialorder %v1040, 8.507059e+37
          %v1042 = vand.u32 %v887, 2147483648
          %v1043 = vor.u32 1.1754944e-38, %v1042
          %v1044 = vsel %vm1041, %v1043, %v1039
          %v1045 = vmul.f32 1.0, %v1044
          %v1046 = vrcp.pop %v888
          %v1047 = vmul.f32 %v888, %v1046
          %v1048 = vsub.f32 1.0, %v1047
          %v1049 = vmul.f32 %v1046, %v1048
          %v1050 = vadd.f32 %v1046, %v1049
          %vm1051 = vweird.f32 %v888
          %vm1052 = vweird.f32 %v1046
          %vm1053 = vmor %vm1051, %vm1052
          %v1054 = vsel %vm1053, %v1046, %v1050
          %v1055 = vand.u32 2147483647, %v888
          %vm1056 = vcmp.eq.f32.partialorder %v1055, 8.507059e+37
          %v1057 = vand.u32 %v888, 2147483648
          %v1058 = vor.u32 1.1754944e-38, %v1057
          %v1059 = vsel %vm1056, %v1058, %v1054
          %v1060 = vmul.f32 1.0, %v1059
          %v1061 = vrcp.pop %v889
          %v1062 = vmul.f32 %v889, %v1061
          %v1063 = vsub.f32 1.0, %v1062
          %v1064 = vmul.f32 %v1061, %v1063
          %v1065 = vadd.f32 %v1061, %v1064
          %vm1066 = vweird.f32 %v889
          %vm1067 = vweird.f32 %v1061
          %vm1068 = vmor %vm1066, %vm1067
          %v1069 = vsel %vm1068, %v1061, %v1065
          %v1070 = vand.u32 2147483647, %v889
          %vm1071 = vcmp.eq.f32.partialorder %v1070, 8.507059e+37
          %v1072 = vand.u32 %v889, 2147483648
          %v1073 = vor.u32 1.1754944e-38, %v1072
          %v1074 = vsel %vm1071, %v1073, %v1069
          %v1075 = vmul.f32 1.0, %v1074
          %v1076 = vrcp.pop %v890
          %v1077 = vmul.f32 %v890, %v1076
          %v1078 = vsub.f32 1.0, %v1077
          %v1079 = vmul.f32 %v1076, %v1078
          %v1080 = vadd.f32 %v1076, %v1079
          %vm1081 = vweird.f32 %v890
          %vm1082 = vweird.f32 %v1076
          %vm1083 = vmor %vm1081, %vm1082
          %v1084 = vsel %vm1083, %v1076, %v1080
          %v1085 = vand.u32 2147483647, %v890
          %vm1086 = vcmp.eq.f32.partialorder %v1085, 8.507059e+37
          %v1087 = vand.u32 %v890, 2147483648
          %v1088 = vor.u32 1.1754944e-38, %v1087
          %v1089 = vsel %vm1086, %v1088, %v1084
          %v1090 = vmul.f32 1.0, %v1089
          %v1091 = vrcp.pop %v891
          %v1092 = vmul.f32 %v891, %v1091
          %v1093 = vsub.f32 1.0, %v1092
          %v1094 = vmul.f32 %v1091, %v1093
          %v1095 = vadd.f32 %v1091, %v1094
          %vm1096 = vweird.f32 %v891
          %vm1097 = vweird.f32 %v1091
          %vm1098 = vmor %vm1096, %vm1097
          %v1099 = vsel %vm1098, %v1091, %v1095
          %v1100 = vand.u32 2147483647, %v891
          %vm1101 = vcmp.eq.f32.partialorder %v1100, 8.507059e+37
          %v1102 = vand.u32 %v891, 2147483648
          %v1103 = vor.u32 1.1754944e-38, %v1102
          %v1104 = vsel %vm1101, %v1103, %v1099
          %v1105 = vmul.f32 1.0, %v1104
          %v1106 = vrcp.pop %v892
          %v1107 = vmul.f32 %v892, %v1106
          %v1108 = vsub.f32 1.0, %v1107
          %v1109 = vmul.f32 %v1106, %v1108
          %v1110 = vadd.f32 %v1106, %v1109
          %vm1111 = vweird.f32 %v892
          %vm1112 = vweird.f32 %v1106
          %vm1113 = vmor %vm1111, %vm1112
          %v1114 = vsel %vm1113, %v1106, %v1110
          %v1115 = vand.u32 2147483647, %v892
          %vm1116 = vcmp.eq.f32.partialorder %v1115, 8.507059e+37
          %v1117 = vand.u32 %v892, 2147483648
          %v1118 = vor.u32 1.1754944e-38, %v1117
          %v1119 = vsel %vm1116, %v1118, %v1114
          %v1120 = vmul.f32 1.0, %v1119
          %v1121 = vrcp.pop %v893
          %v1122 = vmul.f32 %v893, %v1121
          %v1123 = vsub.f32 1.0, %v1122
          %v1124 = vmul.f32 %v1121, %v1123
          %v1125 = vadd.f32 %v1121, %v1124
          %vm1126 = vweird.f32 %v893
          %vm1127 = vweird.f32 %v1121
          %vm1128 = vmor %vm1126, %vm1127
          %v1129 = vsel %vm1128, %v1121, %v1125
          %v1130 = vand.u32 2147483647, %v893
          %vm1131 = vcmp.eq.f32.partialorder %v1130, 8.507059e+37
          %v1132 = vand.u32 %v893, 2147483648
          %v1133 = vor.u32 1.1754944e-38, %v1132
          %v1134 = vsel %vm1131, %v1133, %v1129
          %v1135 = vmul.f32 1.0, %v1134
          %v1136 = vrcp.pop %v894
          %v1137 = vmul.f32 %v894, %v1136
          %v1138 = vsub.f32 1.0, %v1137
          %v1139 = vmul.f32 %v1136, %v1138
          %v1140 = vadd.f32 %v1136, %v1139
          %vm1141 = vweird.f32 %v894
          %vm1142 = vweird.f32 %v1136
          %vm1143 = vmor %vm1141, %vm1142
          %v1144 = vsel %vm1143, %v1136, %v1140
          %v1145 = vand.u32 2147483647, %v894
          %vm1146 = vcmp.eq.f32.partialorder %v1145, 8.507059e+37
          %v1147 = vand.u32 %v894, 2147483648
          %v1148 = vor.u32 1.1754944e-38, %v1147
          %v1149 = vsel %vm1146, %v1148, %v1144
          %v1150 = vmul.f32 1.0, %v1149
          %v1151 = vrcp.pop %v895
          %v1152 = vmul.f32 %v895, %v1151
          %v1153 = vsub.f32 1.0, %v1152
          %v1154 = vmul.f32 %v1151, %v1153
          %v1155 = vadd.f32 %v1151, %v1154
          %vm1156 = vweird.f32 %v895
          %vm1157 = vweird.f32 %v1151
          %vm1158 = vmor %vm1156, %vm1157
          %v1159 = vsel %vm1158, %v1151, %v1155
          %v1160 = vand.u32 2147483647, %v895
          %vm1161 = vcmp.eq.f32.partialorder %v1160, 8.507059e+37
          %v1162 = vand.u32 %v895, 2147483648
          %v1163 = vor.u32 1.1754944e-38, %v1162
          %v1164 = vsel %vm1161, %v1163, %v1159
          %v1165 = vmul.f32 1.0, %v1164
          %v1166 = vrcp.pop %v896
          %v1167 = vmul.f32 %v896, %v1166
          %v1168 = vsub.f32 1.0, %v1167
          %v1169 = vmul.f32 %v1166, %v1168
          %v1170 = vadd.f32 %v1166, %v1169
          %vm1171 = vweird.f32 %v896
          %vm1172 = vweird.f32 %v1166
          %vm1173 = vmor %vm1171, %vm1172
          %v1174 = vsel %vm1173, %v1166, %v1170
          %v1175 = vand.u32 2147483647, %v896
          %vm1176 = vcmp.eq.f32.partialorder %v1175, 8.507059e+37
          %v1177 = vand.u32 %v896, 2147483648
          %v1178 = vor.u32 1.1754944e-38, %v1177
          %v1179 = vsel %vm1176, %v1178, %v1174
          %v1180 = vmul.f32 1.0, %v1179
          %v1181 = vrcp.pop %v897
          %v1182 = vmul.f32 %v897, %v1181
          %v1183 = vsub.f32 1.0, %v1182
          %v1184 = vmul.f32 %v1181, %v1183
          %v1185 = vadd.f32 %v1181, %v1184
          %vm1186 = vweird.f32 %v897
          %vm1187 = vweird.f32 %v1181
          %vm1188 = vmor %vm1186, %vm1187
          %v1189 = vsel %vm1188, %v1181, %v1185
          %v1190 = vand.u32 2147483647, %v897
          %vm1191 = vcmp.eq.f32.partialorder %v1190, 8.507059e+37
          %v1192 = vand.u32 %v897, 2147483648
          %v1193 = vor.u32 1.1754944e-38, %v1192
          %v1194 = vsel %vm1191, %v1193, %v1189
          %v1195 = vmul.f32 1.0, %v1194
          %v1196 = vrcp.pop %v898
          %v1197 = vmul.f32 %v898, %v1196
          %v1198 = vsub.f32 1.0, %v1197
          %v1199 = vmul.f32 %v1196, %v1198
          %v1200 = vadd.f32 %v1196, %v1199
          %vm1201 = vweird.f32 %v898
          %vm1202 = vweird.f32 %v1196
          %vm1203 = vmor %vm1201, %vm1202
          %v1204 = vsel %vm1203, %v1196, %v1200
          %v1205 = vand.u32 2147483647, %v898
          %vm1206 = vcmp.eq.f32.partialorder %v1205, 8.507059e+37
          %v1207 = vand.u32 %v898, 2147483648
          %v1208 = vor.u32 1.1754944e-38, %v1207
          %v1209 = vsel %vm1206, %v1208, %v1204
          %v1210 = vmul.f32 1.0, %v1209
          %v1211 = vrcp.pop %v899
          %v1212 = vmul.f32 %v899, %v1211
          %v1213 = vsub.f32 1.0, %v1212
          %v1214 = vmul.f32 %v1211, %v1213
          %v1215 = vadd.f32 %v1211, %v1214
          %vm1216 = vweird.f32 %v899
          %vm1217 = vweird.f32 %v1211
          %vm1218 = vmor %vm1216, %vm1217
          %v1219 = vsel %vm1218, %v1211, %v1215
          %v1220 = vand.u32 2147483647, %v899
          %vm1221 = vcmp.eq.f32.partialorder %v1220, 8.507059e+37
          %v1222 = vand.u32 %v899, 2147483648
          %v1223 = vor.u32 1.1754944e-38, %v1222
          %v1224 = vsel %vm1221, %v1223, %v1219
          %v1225 = vmul.f32 1.0, %v1224
          %v1226 = vrcp.pop %v900
          %v1227 = vmul.f32 %v900, %v1226
          %v1228 = vsub.f32 1.0, %v1227
          %v1229 = vmul.f32 %v1226, %v1228
          %v1230 = vadd.f32 %v1226, %v1229
          %vm1231 = vweird.f32 %v900
          %vm1232 = vweird.f32 %v1226
          %vm1233 = vmor %vm1231, %vm1232
          %v1234 = vsel %vm1233, %v1226, %v1230
          %v1235 = vand.u32 2147483647, %v900
          %vm1236 = vcmp.eq.f32.partialorder %v1235, 8.507059e+37
          %v1237 = vand.u32 %v900, 2147483648
          %v1238 = vor.u32 1.1754944e-38, %v1237
          %v1239 = vsel %vm1236, %v1238, %v1234
          %v1240 = vmul.f32 1.0, %v1239
          %v1241 = vrcp.pop %v901
          %v1242 = vmul.f32 %v901, %v1241
          %v1243 = vsub.f32 1.0, %v1242
          %v1244 = vmul.f32 %v1241, %v1243
          %v1245 = vadd.f32 %v1241, %v1244
          %vm1246 = vweird.f32 %v901
          %vm1247 = vweird.f32 %v1241
          %vm1248 = vmor %vm1246, %vm1247
          %v1249 = vsel %vm1248, %v1241, %v1245
          %v1250 = vand.u32 2147483647, %v901
          %vm1251 = vcmp.eq.f32.partialorder %v1250, 8.507059e+37
          %v1252 = vand.u32 %v901, 2147483648
          %v1253 = vor.u32 1.1754944e-38, %v1252
          %v1254 = vsel %vm1251, %v1253, %v1249
          %v1255 = vmul.f32 1.0, %v1254
          %v1256 = vrcp.pop %v902
          %v1257 = vmul.f32 %v902, %v1256
          %v1258 = vsub.f32 1.0, %v1257
          %v1259 = vmul.f32 %v1256, %v1258
          %v1260 = vadd.f32 %v1256, %v1259
          %vm1261 = vweird.f32 %v902
          %vm1262 = vweird.f32 %v1256
          %vm1263 = vmor %vm1261, %vm1262
          %v1264 = vsel %vm1263, %v1256, %v1260
          %v1265 = vand.u32 2147483647, %v902
          %vm1266 = vcmp.eq.f32.partialorder %v1265, 8.507059e+37
          %v1267 = vand.u32 %v902, 2147483648
          %v1268 = vor.u32 1.1754944e-38, %v1267
          %v1269 = vsel %vm1266, %v1268, %v1264
          %v1270 = vmul.f32 1.0, %v1269
          %v1271 = vrcp.pop %v903
          %v1272 = vmul.f32 %v903, %v1271
          %v1273 = vsub.f32 1.0, %v1272
          %v1274 = vmul.f32 %v1271, %v1273
          %v1275 = vadd.f32 %v1271, %v1274
          %vm1276 = vweird.f32 %v903
          %vm1277 = vweird.f32 %v1271
          %vm1278 = vmor %vm1276, %vm1277
          %v1279 = vsel %vm1278, %v1271, %v1275
          %v1280 = vand.u32 2147483647, %v903
          %vm1281 = vcmp.eq.f32.partialorder %v1280, 8.507059e+37
          %v1282 = vand.u32 %v903, 2147483648
          %v1283 = vor.u32 1.1754944e-38, %v1282
          %v1284 = vsel %vm1281, %v1283, %v1279
          %v1285 = vmul.f32 1.0, %v1284
          %v1286 = vrcp.pop %v904
          %v1287 = vmul.f32 %v904, %v1286
          %v1288 = vsub.f32 1.0, %v1287
          %v1289 = vmul.f32 %v1286, %v1288
          %v1290 = vadd.f32 %v1286, %v1289
          %vm1291 = vweird.f32 %v904
          %vm1292 = vweird.f32 %v1286
          %vm1293 = vmor %vm1291, %vm1292
          %v1294 = vsel %vm1293, %v1286, %v1290
          %v1295 = vand.u32 2147483647, %v904
          %vm1296 = vcmp.eq.f32.partialorder %v1295, 8.507059e+37
          %v1297 = vand.u32 %v904, 2147483648
          %v1298 = vor.u32 1.1754944e-38, %v1297
          %v1299 = vsel %vm1296, %v1298, %v1294
          %v1300 = vmul.f32 1.0, %v1299
          %v1301 = vrcp.pop %v905
          %v1302 = vmul.f32 %v905, %v1301
          %v1303 = vsub.f32 1.0, %v1302
          %v1304 = vmul.f32 %v1301, %v1303
          %v1305 = vadd.f32 %v1301, %v1304
          %vm1306 = vweird.f32 %v905
          %vm1307 = vweird.f32 %v1301
          %vm1308 = vmor %vm1306, %vm1307
          %v1309 = vsel %vm1308, %v1301, %v1305
          %v1310 = vand.u32 2147483647, %v905
          %vm1311 = vcmp.eq.f32.partialorder %v1310, 8.507059e+37
          %v1312 = vand.u32 %v905, 2147483648
          %v1313 = vor.u32 1.1754944e-38, %v1312
          %v1314 = vsel %vm1311, %v1313, %v1309
          %v1315 = vmul.f32 1.0, %v1314
          %v1316 = vrcp.pop %v906
          %v1317 = vmul.f32 %v906, %v1316
          %v1318 = vsub.f32 1.0, %v1317
          %v1319 = vmul.f32 %v1316, %v1318
          %v1320 = vadd.f32 %v1316, %v1319
          %vm1321 = vweird.f32 %v906
          %vm1322 = vweird.f32 %v1316
          %vm1323 = vmor %vm1321, %vm1322
          %v1324 = vsel %vm1323, %v1316, %v1320
          %v1325 = vand.u32 2147483647, %v906
          %vm1326 = vcmp.eq.f32.partialorder %v1325, 8.507059e+37
          %v1327 = vand.u32 %v906, 2147483648
          %v1328 = vor.u32 1.1754944e-38, %v1327
          %v1329 = vsel %vm1326, %v1328, %v1324
          %v1330 = vmul.f32 1.0, %v1329
          %v1331 = vrcp.pop %v907
          %v1332 = vmul.f32 %v907, %v1331
          %v1333 = vsub.f32 1.0, %v1332
          %v1334 = vmul.f32 %v1331, %v1333
          %v1335 = vadd.f32 %v1331, %v1334
          %vm1336 = vweird.f32 %v907
          %vm1337 = vweird.f32 %v1331
          %vm1338 = vmor %vm1336, %vm1337
          %v1339 = vsel %vm1338, %v1331, %v1335
          %v1340 = vand.u32 2147483647, %v907
          %vm1341 = vcmp.eq.f32.partialorder %v1340, 8.507059e+37
          %v1342 = vand.u32 %v907, 2147483648
          %v1343 = vor.u32 1.1754944e-38, %v1342
          %v1344 = vsel %vm1341, %v1343, %v1339
          %v1345 = vmul.f32 1.0, %v1344
          %v1346 = vrcp.pop %v908
          %v1347 = vmul.f32 %v908, %v1346
          %v1348 = vsub.f32 1.0, %v1347
          %v1349 = vmul.f32 %v1346, %v1348
          %v1350 = vadd.f32 %v1346, %v1349
          %vm1351 = vweird.f32 %v908
          %vm1352 = vweird.f32 %v1346
          %vm1353 = vmor %vm1351, %vm1352
          %v1354 = vsel %vm1353, %v1346, %v1350
          %v1355 = vand.u32 2147483647, %v908
          %vm1356 = vcmp.eq.f32.partialorder %v1355, 8.507059e+37
          %v1357 = vand.u32 %v908, 2147483648
          %v1358 = vor.u32 1.1754944e-38, %v1357
          %v1359 = vsel %vm1356, %v1358, %v1354
          %v1360 = vmul.f32 1.0, %v1359
          %v1361 = vrcp.pop %v909
          %v1362 = vmul.f32 %v909, %v1361
          %v1363 = vsub.f32 1.0, %v1362
          %v1364 = vmul.f32 %v1361, %v1363
          %v1365 = vadd.f32 %v1361, %v1364
          %vm1366 = vweird.f32 %v909
          %vm1367 = vweird.f32 %v1361
          %vm1368 = vmor %vm1366, %vm1367
          %v1369 = vsel %vm1368, %v1361, %v1365
          %v1370 = vand.u32 2147483647, %v909
          %vm1371 = vcmp.eq.f32.partialorder %v1370, 8.507059e+37
          %v1372 = vand.u32 %v909, 2147483648
          %v1373 = vor.u32 1.1754944e-38, %v1372
          %v1374 = vsel %vm1371, %v1373, %v1369
          %v1375 = vmul.f32 1.0, %v1374
          %v1376 = vrcp.pop %v910
          %v1377 = vmul.f32 %v910, %v1376
          %v1378 = vsub.f32 1.0, %v1377
          %v1379 = vmul.f32 %v1376, %v1378
          %v1380 = vadd.f32 %v1376, %v1379
          %vm1381 = vweird.f32 %v910
          %vm1382 = vweird.f32 %v1376
          %vm1383 = vmor %vm1381, %vm1382
          %v1384 = vsel %vm1383, %v1376, %v1380
          %v1385 = vand.u32 2147483647, %v910
          %vm1386 = vcmp.eq.f32.partialorder %v1385, 8.507059e+37
          %v1387 = vand.u32 %v910, 2147483648
          %v1388 = vor.u32 1.1754944e-38, %v1387
          %v1389 = vsel %vm1386, %v1388, %v1384
          %v1390 = vmul.f32 1.0, %v1389
          %v1391 = vmul.f32 %v751, %v925
          %v1392 = vmul.f32 %v752, %v940
          %v1393 = vmul.f32 %v753, %v955
          %v1394 = vmul.f32 %v754, %v970
          %v1395 = vmul.f32 %v755, %v985
          %v1396 = vmul.f32 %v756, %v1000
          %v1397 = vmul.f32 %v757, %v1015
          %v1398 = vmul.f32 %v758, %v1030
          %v1399 = vmul.f32 %v759, %v1045
          %v1400 = vmul.f32 %v760, %v1060
          %v1401 = vmul.f32 %v761, %v1075
          %v1402 = vmul.f32 %v762, %v1090
          %v1403 = vmul.f32 %v763, %v1105
          %v1404 = vmul.f32 %v764, %v1120
          %v1405 = vmul.f32 %v765, %v1135
          %v1406 = vmul.f32 %v766, %v1150
          %v1407 = vmul.f32 %v767, %v1165
          %v1408 = vmul.f32 %v768, %v1180
          %v1409 = vmul.f32 %v769, %v1195
          %v1410 = vmul.f32 %v770, %v1210
          %v1411 = vmul.f32 %v771, %v1225
          %v1412 = vmul.f32 %v772, %v1240
          %v1413 = vmul.f32 %v773, %v1255
          %v1414 = vmul.f32 %v774, %v1270
          %v1415 = vmul.f32 %v775, %v1285
          %v1416 = vmul.f32 %v776, %v1300
          %v1417 = vmul.f32 %v777, %v1315
          %v1418 = vmul.f32 %v778, %v1330
          %v1419 = vmul.f32 %v779, %v1345
          %v1420 = vmul.f32 %v780, %v1360
          %v1421 = vmul.f32 %v781, %v1375
          %v1422 = vmul.f32 %v782, %v1390
          %v1423 = vpack.c.bf16 %v1391, %v1391
          %v1424 = vpack.c.bf16 %v1392, %v1392
          %v1425 = vpack.c.bf16 %v1393, %v1393
          %v1426 = vpack.c.bf16 %v1394, %v1394
          %v1427 = vpack.c.bf16 %v1395, %v1395
          %v1428 = vpack.c.bf16 %v1396, %v1396
          %v1429 = vpack.c.bf16 %v1397, %v1397
          %v1430 = vpack.c.bf16 %v1398, %v1398
          %v1431 = vpack.c.bf16 %v1399, %v1399
          %v1432 = vpack.c.bf16 %v1400, %v1400
          %v1433 = vpack.c.bf16 %v1401, %v1401
          %v1434 = vpack.c.bf16 %v1402, %v1402
          %v1435 = vpack.c.bf16 %v1403, %v1403
          %v1436 = vpack.c.bf16 %v1404, %v1404
          %v1437 = vpack.c.bf16 %v1405, %v1405
          %v1438 = vpack.c.bf16 %v1406, %v1406
          %v1439 = vpack.c.bf16 %v1407, %v1407
          %v1440 = vpack.c.bf16 %v1408, %v1408
          %v1441 = vpack.c.bf16 %v1409, %v1409
          %v1442 = vpack.c.bf16 %v1410, %v1410
          %v1443 = vpack.c.bf16 %v1411, %v1411
          %v1444 = vpack.c.bf16 %v1412, %v1412
          %v1445 = vpack.c.bf16 %v1413, %v1413
          %v1446 = vpack.c.bf16 %v1414, %v1414
          %v1447 = vpack.c.bf16 %v1415, %v1415
          %v1448 = vpack.c.bf16 %v1416, %v1416
          %v1449 = vpack.c.bf16 %v1417, %v1417
          %v1450 = vpack.c.bf16 %v1418, %v1418
          %v1451 = vpack.c.bf16 %v1419, %v1419
          %v1452 = vpack.c.bf16 %v1420, %v1420
          %v1453 = vpack.c.bf16 %v1421, %v1421
          %v1454 = vpack.c.bf16 %v1422, %v1422
          %1455 = vst [vmem:[%s263] sm:$0xf] %v1423
          %1456 = vst [vmem:[%s263 + $0x4] sm:$0xf] %v1424
          %1457 = vst [vmem:[%s263 + $0x8] sm:$0xf] %v1425
          %1458 = vst [vmem:[%s263 + $0xc] sm:$0xf] %v1426
          %1459 = vst [vmem:[%s263 + $0x10] sm:$0xf] %v1427
          %1460 = vst [vmem:[%s263 + $0x14] sm:$0xf] %v1428
          %1461 = vst [vmem:[%s263 + $0x18] sm:$0xf] %v1429
          %1462 = vst [vmem:[%s263 + $0x1c] sm:$0xf] %v1430
          %1463 = vst [vmem:[%s263 + $0x20] sm:$0xf] %v1431
          %1464 = vst [vmem:[%s263 + $0x24] sm:$0xf] %v1432
          %1465 = vst [vmem:[%s263 + $0x28] sm:$0xf] %v1433
          %1466 = vst [vmem:[%s263 + $0x2c] sm:$0xf] %v1434
          %1467 = vst [vmem:[%s263 + $0x30] sm:$0xf] %v1435
          %1468 = vst [vmem:[%s263 + $0x34] sm:$0xf] %v1436
          %1469 = vst [vmem:[%s263 + $0x38] sm:$0xf] %v1437
          %1470 = vst [vmem:[%s263 + $0x3c] sm:$0xf] %v1438
          %1471 = vst [vmem:[%s263 + $0x40] sm:$0xf] %v1439
          %1472 = vst [vmem:[%s263 + $0x44] sm:$0xf] %v1440
          %1473 = vst [vmem:[%s263 + $0x48] sm:$0xf] %v1441
          %1474 = vst [vmem:[%s263 + $0x4c] sm:$0xf] %v1442
          %1475 = vst [vmem:[%s263 + $0x50] sm:$0xf] %v1443
          %1476 = vst [vmem:[%s263 + $0x54] sm:$0xf] %v1444
          %1477 = vst [vmem:[%s263 + $0x58] sm:$0xf] %v1445
          %1478 = vst [vmem:[%s263 + $0x5c] sm:$0xf] %v1446
          %1479 = vst [vmem:[%s263 + $0x60] sm:$0xf] %v1447
          %1480 = vst [vmem:[%s263 + $0x64] sm:$0xf] %v1448
          %1481 = vst [vmem:[%s263 + $0x68] sm:$0xf] %v1449
          %1482 = vst [vmem:[%s263 + $0x6c] sm:$0xf] %v1450
          %1483 = vst [vmem:[%s263 + $0x70] sm:$0xf] %v1451
          %1484 = vst [vmem:[%s263 + $0x74] sm:$0xf] %v1452
          %1485 = vst [vmem:[%s263 + $0x78] sm:$0xf] %v1453
          %1486 = vst [vmem:[%s263 + $0x7c] sm:$0xf] %v1454
        $region52: #{tpu_custom_call.1} parent=31 // pred_fallthru
          _
        %s1487 = sand.u32 %s132, 1
        %s1488 = scalar_lea.sflag [#allocation5], %s1487
        %s1489 = sand.u32 %s132, 1
        %s1490 = smul.addr %s1489, 128
        %s1491 = scalar_lea.vmem [#allocation9], %s1490
        // Predicated region
        $region53: #{tpu_custom_call.1} parent=31 // pred_check
          %p1492 = pneg %p142
        $region54: #{tpu_custom_call.1} parent=31 // pred_check_branch
          %1494 = sbr.rel (%p1492) target = $region56
        $region55: #{tpu_custom_call.1} parent=31 // pred_region
          %s1495 = smul.u32 32, %s26
          %1497 = vsyncadd %s1488, 0
          %s1498 = sadd.s32 %s27, %s1495
          %s1499 = smul.addr %s1498, 4
          %s1500 = scalar_lea.hbm %s3, %s1499
          %s1501 = sshll.u32 %s1491, 4
          %s1502 = int_to_ptr.vmem [resolvable:$true] %s1501
          %s1503 = sshll.u32 %s1500, 4
          %s1504 = int_to_ptr.hbm [resolvable:$true] %s1503
          %1509 = dma.vmem_to_hbm [thread:$0]  %s1502, 2048, %s1504, %s1488, 64, 64, 4
        $region56: #{tpu_custom_call.1} parent=31 // pred_fallthru
          _
      $region32: #{tpu_custom_call.1} parent=5 // pred_fallthru
        _
      %p1510 = scmp.le.s32.totalorder 2, %s16
      // Predicated region
      $region57: #{tpu_custom_call.1} parent=5 // pred_check
        %p1511 = pneg %p1510
      $region58: #{tpu_custom_call.1} parent=5 // pred_check_branch
        %1513 = sbr.rel (%p1511) target = $region60
      $region59: #{tpu_custom_call.1} parent=5 // pred_region
        %s1514 = ssub.s32 %s16, 2
        // Predicated region
        $region61: #{tpu_custom_call.1} parent=59 // pred_check
          %p1515 = pneg %p148
        $region62: #{tpu_custom_call.1} parent=59 // pred_check_branch
          %1517 = sbr.rel (%p1515) target = $region64
        $region63: #{tpu_custom_call.1} parent=59 // pred_region
          %s1518 = sand.u32 %s133, 1
          %s1519 = scalar_lea.sflag [#allocation5], %s1518
          %s1520 = sand.u32 %s133, 1
          %s1521 = smul.addr %s1520, 128
          %s1522 = scalar_lea.vmem [#allocation9], %s1521
          %1524 = dma.done %s1519, 2048
        $region64: #{tpu_custom_call.1} parent=59 // pred_fallthru
          _
      $region60: #{tpu_custom_call.1} parent=5 // pred_fallthru
        _
    $region6: #{tpu_custom_call.1} parent=1 // loop_footer
      %s20 = sadd.s32 1, %s16
    $region7: #{tpu_custom_call.1} parent=1 // loop_footer_branch
      %15 = sbr.rel target = $region3
    $region8: #{tpu_custom_call.1} parent=1 // loop_exit
      _
    %1525 = vsyncpa [#allocation4], 1
    %s1526 = scalar_lea.sflag [#allocation4], 1
    %1527 = vsyncpa %s1526, 1
    %1528 = vsyncpa [#allocation7], 1
    %1529 = vsyncpa [#allocation5], 1
    %s1530 = scalar_lea.sflag [#allocation5], 1
    %1531 = vsyncpa %s1530, 1

</llo_original>
